<compile_context>
chip_gen: v7x
topology: tpu7x:2x2x1
jax: 0.10.0
libtpu: 0.0.40
codegen_flags: <defaults>
</compile_context>

<pallas_src>
import math
import functools

import jax
import jax.numpy as jnp
from jax.experimental import pallas as pl
from jax.experimental.pallas import tpu as pltpu

# ----- model config (small, consistent with the module) -----
B = 2          # batch
T = 8          # sequence length (== block_size)
N_EMBD = 32    # n_embd
N_HEAD = 4     # n_head
HEAD = N_EMBD // N_HEAD
BLOCK_SIZE = 8


def mha_kernel(x_ref, wqkv_ref, bqkv_ref, wproj_ref, bproj_ref, bias_ref, o_ref,
               *, n_head, head_size, batch, seq_len):
    """Single invocation: whole problem in VMEM.

    x_ref:     (B*T, C)
    wqkv_ref:  (C, 3C)   c_attn weight, (in, out) orientation
    bqkv_ref:  (1, 3C)
    wproj_ref: (C, C)    c_proj weight, (in, out) orientation
    bproj_ref: (1, C)
    bias_ref:  (T, T)    additive causal bias (0 where allowed, -1e30 where masked)
    o_ref:     (B*T, C)
    """
    bt = batch * seq_len
    c = n_head * head_size
    scale = 1.0 / math.sqrt(head_size)

    x2 = x_ref[...]                                                    # (BT, C) f32

    # --- QKV projection: one lane-dense (BT, C) x (C, 3C) matmul, single MXU push. ---
    qkv = jnp.dot(x2, wqkv_ref[...],
                  preferred_element_type=jnp.float32) + bqkv_ref[...]  # (BT, 3C)

    # Additive causal bias, broadcast hoisted once (not per head).
    bias3 = jnp.broadcast_to(bias_ref[...][None, :, :],
                             (batch, seq_len, seq_len))                # (B, T, T)

    # --- per-head attention: heads come out as static lane slices of the qkv slab. ---
    head_outs = []
    for h in range(n_head):
        q_h = qkv[:, 0 * c + h * head_size: 0 * c + (h + 1) * head_size] * scale
        k_h = qkv[:, 1 * c + h * head_size: 1 * c + (h + 1) * head_size]
        v_h = qkv[:, 2 * c + h * head_size: 2 * c + (h + 1) * head_size]

        # (BT, hs) -> (B, T, hs): splits the row axis only (sublane-aligned, layout-free).
        q_h = q_h.reshape(batch, seq_len, head_size)
        k_h = k_h.reshape(batch, seq_len, head_size)
        v_h = v_h.reshape(batch, seq_len, head_size)

        s = jnp.einsum('bqd,bkd->bqk', q_h, k_h,
                       preferred_element_type=jnp.float32)             # (B, T, T)
        s = s + bias3                                                  # causal mask (add)

        # numerically-stable softmax along the key axis (exact division).
        m = jnp.max(s, axis=-1, keepdims=True)
        p = jnp.exp(s - m)
        l = jnp.sum(p, axis=-1, keepdims=True)
        w = p / l

        o_h = jnp.einsum('bqk,bkd->bqd', w, v_h,
                         preferred_element_type=jnp.float32)           # (B, T, hs)
        head_outs.append(o_h.reshape(bt, head_size))                   # (BT, hs)

    # --- fused output projection: concat heads on the lane axis, one (BT,C)x(C,C) matmul. ---
    o2 = jnp.concatenate(head_outs, axis=-1)                           # (BT, C)
    y = jnp.dot(o2, wproj_ref[...],
                preferred_element_type=jnp.float32) + bproj_ref[...]   # (BT, C)
    o_ref[...] = y.astype(o_ref.dtype)


def multi_head_attention(x, wqkv_t, bqkv, wproj_t, bproj, *, n_head):
    """x: (B, T, C); wqkv_t: (C, 3C); bqkv: (1, 3C); wproj_t: (C, C); bproj: (1, C).

    Weights are nn.Linear weights pre-transposed to (in, out); no other re-layout needed.
    """
    b, t, c = x.shape
    hs = c // n_head

    # Fold batch into rows for the projections only (scores stay per-batch).
    x2 = x.reshape(b * t, c)

    # Precomputed additive causal bias (0 / -1e30); diagonal always allowed -> no empty rows.
    causal = jnp.tril(jnp.ones((t, t), dtype=bool))
    bias = jnp.where(causal, 0.0, -1e30).astype(jnp.float32)

    kernel = functools.partial(mha_kernel, n_head=n_head, head_size=hs,
                               batch=b, seq_len=t)
    vmem = pltpu.MemorySpace.VMEM
    y2 = pl.pallas_call(
        kernel,
        out_shape=jax.ShapeDtypeStruct((b * t, c), x.dtype),
        in_specs=[pl.BlockSpec(memory_space=vmem) for _ in range(6)],
        out_specs=pl.BlockSpec(memory_space=vmem),
    )(x2, wqkv_t, bqkv, wproj_t, bproj, bias)
    return y2.reshape(b, t, c)


def reference_mha(x, wqkv_t, bqkv, wproj_t, bproj, *, n_head):
    """Pure-JAX reference mirroring the PyTorch forward (eval mode)."""
    b, t, c = x.shape
    hs = c // n_head
    qkv = x @ wqkv_t + bqkv                              # (B, T, 3C)
    q, k, v = jnp.split(qkv, 3, axis=-1)

    def split_heads(z):
        return z.reshape(b, t, n_head, hs).transpose(0, 2, 1, 3)   # (B, H, T, hs)

    q, k, v = split_heads(q), split_heads(k), split_heads(v)
    s = (q @ jnp.swapaxes(k, -1, -2)) / math.sqrt(hs)              # (B, H, T, T)
    mask = jnp.tril(jnp.ones((t, t), dtype=bool))
    s = jnp.where(mask[None, None], s, -jnp.inf)
    w = jax.nn.softmax(s, axis=-1)
    out = w @ v                                                    # (B, H, T, hs)
    out = out.transpose(0, 2, 1, 3).reshape(b, t, c)
    return out @ wproj_t + bproj


if __name__ == "__main__":
    key = jax.random.PRNGKey(0)
    kx, k1, k2, k3, k4 = jax.random.split(key, 5)

    x = jax.random.normal(kx, (B, T, N_EMBD), dtype=jnp.float32)

    # nn.Linear-style deterministic init: U(-1/sqrt(fan_in), 1/sqrt(fan_in)),
    # stored pre-transposed as (in, out).
    bound = 1.0 / math.sqrt(N_EMBD)
    wqkv_t = jax.random.uniform(k1, (N_EMBD, 3 * N_EMBD), jnp.float32, -bound, bound)
    bqkv = jax.random.uniform(k2, (1, 3 * N_EMBD), jnp.float32, -bound, bound)
    wproj_t = jax.random.uniform(k3, (N_EMBD, N_EMBD), jnp.float32, -bound, bound)
    bproj = jax.random.uniform(k4, (1, N_EMBD), jnp.float32, -bound, bound)

    y = multi_head_attention(x, wqkv_t, bqkv, wproj_t, bproj, n_head=N_HEAD)
    y = jax.block_until_ready(y)

    y_ref = reference_mha(x, wqkv_t, bqkv, wproj_t, bproj, n_head=N_HEAD)
    assert y.shape == (B, T, N_EMBD)
    # Tolerance tightened from 1e-2: the approximate reciprocal is gone (exact division),
    # so the remaining slack only covers default MXU matmul precision differences between
    # the Pallas dots and the XLA reference; any layout/indexing bug would be >> 2e-3.
    assert jnp.allclose(y, y_ref, atol=2e-3, rtol=2e-3), "mismatch vs reference"

    print("KERNEL_OK")
</pallas_src>

<mosaic_0001>
module attributes {stable_mosaic.version = 11 : i64} {
  func.func @mha_kernel(%arg0: memref<16x32xf32, #tpu.memory_space<vmem>>, %arg1: memref<32x96xf32, #tpu.memory_space<vmem>>, %arg2: memref<1x96xf32, #tpu.memory_space<vmem>>, %arg3: memref<32x32xf32, #tpu.memory_space<vmem>>, %arg4: memref<1x32xf32, #tpu.memory_space<vmem>>, %arg5: memref<8x8xf32, #tpu.memory_space<vmem>>, %arg6: memref<16x32xf32, #tpu.memory_space<vmem>>) attributes {dimension_semantics = [], scalar_prefetch = 0 : i64, scratch_operands = 0 : i64, tpu.core_type = #tpu.core_type<tc>} {
    %c0 = arith.constant 0 : index
    %c0_0 = arith.constant 0 : index
    %0 = vector.load %arg0[%c0, %c0_0] : memref<16x32xf32, #tpu.memory_space<vmem>>, vector<16x32xf32>
    %c0_1 = arith.constant 0 : index
    %c0_2 = arith.constant 0 : index
    %1 = vector.load %arg1[%c0_1, %c0_2] : memref<32x96xf32, #tpu.memory_space<vmem>>, vector<32x96xf32>
    %cst = arith.constant dense<0.000000e+00> : vector<16x96xf32>
    %2 = tpu.matmul %0, %1, %cst {dimension_numbers = #tpu.dot_dimension_numbers<[1], [0], [0], [1], [0, 0, 1, 1], [], []>} : vector<16x32xf32>, vector<32x96xf32>, vector<16x96xf32> -> vector<16x96xf32>
    %c0_3 = arith.constant 0 : index
    %c0_4 = arith.constant 0 : index
    %3 = vector.load %arg2[%c0_3, %c0_4] : memref<1x96xf32, #tpu.memory_space<vmem>>, vector<1x96xf32>
    %4 = vector.broadcast %3 : vector<1x96xf32> to vector<16x96xf32>
    %5 = arith.addf %2, %4 : vector<16x96xf32>
    %c0_5 = arith.constant 0 : index
    %c0_6 = arith.constant 0 : index
    %6 = vector.load %arg5[%c0_5, %c0_6] : memref<8x8xf32, #tpu.memory_space<vmem>>, vector<8x8xf32>
    %7 = vector.shape_cast %6 : vector<8x8xf32> to vector<1x8x8xf32>
    %8 = vector.shape_cast %7 : vector<1x8x8xf32> to vector<1x8x8xf32>
    %9 = vector.broadcast %8 : vector<1x8x8xf32> to vector<2x8x8xf32>
    %10 = vector.extract_strided_slice %5 {offsets = [0, 0], sizes = [16, 8], strides = [1, 1]} : vector<16x96xf32> to vector<16x8xf32>
    %cst_7 = arith.constant 0.353553385 : f32
    %11 = vector.broadcast %cst_7 : f32 to vector<16x8xf32>
    %12 = arith.mulf %10, %11 : vector<16x8xf32>
    %13 = vector.extract_strided_slice %5 {offsets = [0, 32], sizes = [16, 8], strides = [1, 1]} : vector<16x96xf32> to vector<16x8xf32>
    %14 = vector.extract_strided_slice %5 {offsets = [0, 64], sizes = [16, 8], strides = [1, 1]} : vector<16x96xf32> to vector<16x8xf32>
    %15 = vector.shape_cast %12 : vector<16x8xf32> to vector<2x8x8xf32>
    %16 = vector.shape_cast %13 : vector<16x8xf32> to vector<2x8x8xf32>
    %17 = vector.shape_cast %14 : vector<16x8xf32> to vector<2x8x8xf32>
    "tpu.trace_start"() <{level = 10 : i32, message = "bqd,bkd->bqk"}> : () -> ()
    %cst_8 = arith.constant dense<0.000000e+00> : vector<2x8x8xf32>
    %18 = tpu.matmul %15, %16, %cst_8 {dimension_numbers = #tpu.dot_dimension_numbers<[2], [2], [1], [1], [0, 0, 0, 1, 1, 1], [0], [0]>} : vector<2x8x8xf32>, vector<2x8x8xf32>, vector<2x8x8xf32> -> vector<2x8x8xf32>
    "tpu.trace_stop"() : () -> ()
    %19 = arith.addf %18, %9 : vector<2x8x8xf32>
    %cst_9 = arith.constant dense<0xFF800000> : vector<2x8xf32>
    %20 = vector.multi_reduction <maximumf>, %19, %cst_9 [2] : vector<2x8x8xf32> to vector<2x8xf32>
    %21 = vector.shape_cast %20 : vector<2x8xf32> to vector<2x8x1xf32>
    %22 = vector.broadcast %21 : vector<2x8x1xf32> to vector<2x8x8xf32>
    %23 = arith.subf %19, %22 : vector<2x8x8xf32>
    %24 = math.exp %23 : vector<2x8x8xf32>
    %cst_10 = arith.constant dense<0.000000e+00> : vector<2x8xf32>
    %25 = vector.multi_reduction <add>, %24, %cst_10 [2] : vector<2x8x8xf32> to vector<2x8xf32>
    %26 = vector.shape_cast %25 : vector<2x8xf32> to vector<2x8x1xf32>
    %27 = vector.broadcast %26 : vector<2x8x1xf32> to vector<2x8x8xf32>
    %28 = arith.divf %24, %27 : vector<2x8x8xf32>
    "tpu.trace_start"() <{level = 10 : i32, message = "bqk,bkd->bqd"}> : () -> ()
    %cst_11 = arith.constant dense<0.000000e+00> : vector<2x8x8xf32>
    %29 = tpu.matmul %28, %17, %cst_11 {dimension_numbers = #tpu.dot_dimension_numbers<[2], [1], [1], [2], [0, 0, 0, 1, 1, 2], [0], [0]>} : vector<2x8x8xf32>, vector<2x8x8xf32>, vector<2x8x8xf32> -> vector<2x8x8xf32>
    "tpu.trace_stop"() : () -> ()
    %30 = vector.shape_cast %29 : vector<2x8x8xf32> to vector<16x8xf32>
    %31 = vector.extract_strided_slice %5 {offsets = [0, 8], sizes = [16, 8], strides = [1, 1]} : vector<16x96xf32> to vector<16x8xf32>
    %cst_12 = arith.constant 0.353553385 : f32
    %32 = vector.broadcast %cst_12 : f32 to vector<16x8xf32>
    %33 = arith.mulf %31, %32 : vector<16x8xf32>
    %34 = vector.extract_strided_slice %5 {offsets = [0, 40], sizes = [16, 8], strides = [1, 1]} : vector<16x96xf32> to vector<16x8xf32>
    %35 = vector.extract_strided_slice %5 {offsets = [0, 72], sizes = [16, 8], strides = [1, 1]} : vector<16x96xf32> to vector<16x8xf32>
    %36 = vector.shape_cast %33 : vector<16x8xf32> to vector<2x8x8xf32>
    %37 = vector.shape_cast %34 : vector<16x8xf32> to vector<2x8x8xf32>
    %38 = vector.shape_cast %35 : vector<16x8xf32> to vector<2x8x8xf32>
    "tpu.trace_start"() <{level = 10 : i32, message = "bqd,bkd->bqk"}> : () -> ()
    %cst_13 = arith.constant dense<0.000000e+00> : vector<2x8x8xf32>
    %39 = tpu.matmul %36, %37, %cst_13 {dimension_numbers = #tpu.dot_dimension_numbers<[2], [2], [1], [1], [0, 0, 0, 1, 1, 1], [0], [0]>} : vector<2x8x8xf32>, vector<2x8x8xf32>, vector<2x8x8xf32> -> vector<2x8x8xf32>
    "tpu.trace_stop"() : () -> ()
    %40 = arith.addf %39, %9 : vector<2x8x8xf32>
    %cst_14 = arith.constant dense<0xFF800000> : vector<2x8xf32>
    %41 = vector.multi_reduction <maximumf>, %40, %cst_14 [2] : vector<2x8x8xf32> to vector<2x8xf32>
    %42 = vector.shape_cast %41 : vector<2x8xf32> to vector<2x8x1xf32>
    %43 = vector.broadcast %42 : vector<2x8x1xf32> to vector<2x8x8xf32>
    %44 = arith.subf %40, %43 : vector<2x8x8xf32>
    %45 = math.exp %44 : vector<2x8x8xf32>
    %cst_15 = arith.constant dense<0.000000e+00> : vector<2x8xf32>
    %46 = vector.multi_reduction <add>, %45, %cst_15 [2] : vector<2x8x8xf32> to vector<2x8xf32>
    %47 = vector.shape_cast %46 : vector<2x8xf32> to vector<2x8x1xf32>
    %48 = vector.broadcast %47 : vector<2x8x1xf32> to vector<2x8x8xf32>
    %49 = arith.divf %45, %48 : vector<2x8x8xf32>
    "tpu.trace_start"() <{level = 10 : i32, message = "bqk,bkd->bqd"}> : () -> ()
    %cst_16 = arith.constant dense<0.000000e+00> : vector<2x8x8xf32>
    %50 = tpu.matmul %49, %38, %cst_16 {dimension_numbers = #tpu.dot_dimension_numbers<[2], [1], [1], [2], [0, 0, 0, 1, 1, 2], [0], [0]>} : vector<2x8x8xf32>, vector<2x8x8xf32>, vector<2x8x8xf32> -> vector<2x8x8xf32>
    "tpu.trace_stop"() : () -> ()
    %51 = vector.shape_cast %50 : vector<2x8x8xf32> to vector<16x8xf32>
    %52 = vector.extract_strided_slice %5 {offsets = [0, 16], sizes = [16, 8], strides = [1, 1]} : vector<16x96xf32> to vector<16x8xf32>
    %cst_17 = arith.constant 0.353553385 : f32
    %53 = vector.broadcast %cst_17 : f32 to vector<16x8xf32>
    %54 = arith.mulf %52, %53 : vector<16x8xf32>
    %55 = vector.extract_strided_slice %5 {offsets = [0, 48], sizes = [16, 8], strides = [1, 1]} : vector<16x96xf32> to vector<16x8xf32>
    %56 = vector.extract_strided_slice %5 {offsets = [0, 80], sizes = [16, 8], strides = [1, 1]} : vector<16x96xf32> to vector<16x8xf32>
    %57 = vector.shape_cast %54 : vector<16x8xf32> to vector<2x8x8xf32>
    %58 = vector.shape_cast %55 : vector<16x8xf32> to vector<2x8x8xf32>
    %59 = vector.shape_cast %56 : vector<16x8xf32> to vector<2x8x8xf32>
    "tpu.trace_start"() <{level = 10 : i32, message = "bqd,bkd->bqk"}> : () -> ()
    %cst_18 = arith.constant dense<0.000000e+00> : vector<2x8x8xf32>
    %60 = tpu.matmul %57, %58, %cst_18 {dimension_numbers = #tpu.dot_dimension_numbers<[2], [2], [1], [1], [0, 0, 0, 1, 1, 1], [0], [0]>} : vector<2x8x8xf32>, vector<2x8x8xf32>, vector<2x8x8xf32> -> vector<2x8x8xf32>
    "tpu.trace_stop"() : () -> ()
    %61 = arith.addf %60, %9 : vector<2x8x8xf32>
    %cst_19 = arith.constant dense<0xFF800000> : vector<2x8xf32>
    %62 = vector.multi_reduction <maximumf>, %61, %cst_19 [2] : vector<2x8x8xf32> to vector<2x8xf32>
    %63 = vector.shape_cast %62 : vector<2x8xf32> to vector<2x8x1xf32>
    %64 = vector.broadcast %63 : vector<2x8x1xf32> to vector<2x8x8xf32>
    %65 = arith.subf %61, %64 : vector<2x8x8xf32>
    %66 = math.exp %65 : vector<2x8x8xf32>
    %cst_20 = arith.constant dense<0.000000e+00> : vector<2x8xf32>
    %67 = vector.multi_reduction <add>, %66, %cst_20 [2] : vector<2x8x8xf32> to vector<2x8xf32>
    %68 = vector.shape_cast %67 : vector<2x8xf32> to vector<2x8x1xf32>
    %69 = vector.broadcast %68 : vector<2x8x1xf32> to vector<2x8x8xf32>
    %70 = arith.divf %66, %69 : vector<2x8x8xf32>
    "tpu.trace_start"() <{level = 10 : i32, message = "bqk,bkd->bqd"}> : () -> ()
    %cst_21 = arith.constant dense<0.000000e+00> : vector<2x8x8xf32>
    %71 = tpu.matmul %70, %59, %cst_21 {dimension_numbers = #tpu.dot_dimension_numbers<[2], [1], [1], [2], [0, 0, 0, 1, 1, 2], [0], [0]>} : vector<2x8x8xf32>, vector<2x8x8xf32>, vector<2x8x8xf32> -> vector<2x8x8xf32>
    "tpu.trace_stop"() : () -> ()
    %72 = vector.shape_cast %71 : vector<2x8x8xf32> to vector<16x8xf32>
    %73 = vector.extract_strided_slice %5 {offsets = [0, 24], sizes = [16, 8], strides = [1, 1]} : vector<16x96xf32> to vector<16x8xf32>
    %cst_22 = arith.constant 0.353553385 : f32
    %74 = vector.broadcast %cst_22 : f32 to vector<16x8xf32>
    %75 = arith.mulf %73, %74 : vector<16x8xf32>
    %76 = vector.extract_strided_slice %5 {offsets = [0, 56], sizes = [16, 8], strides = [1, 1]} : vector<16x96xf32> to vector<16x8xf32>
    %77 = vector.extract_strided_slice %5 {offsets = [0, 88], sizes = [16, 8], strides = [1, 1]} : vector<16x96xf32> to vector<16x8xf32>
    %78 = vector.shape_cast %75 : vector<16x8xf32> to vector<2x8x8xf32>
    %79 = vector.shape_cast %76 : vector<16x8xf32> to vector<2x8x8xf32>
    %80 = vector.shape_cast %77 : vector<16x8xf32> to vector<2x8x8xf32>
    "tpu.trace_start"() <{level = 10 : i32, message = "bqd,bkd->bqk"}> : () -> ()
    %cst_23 = arith.constant dense<0.000000e+00> : vector<2x8x8xf32>
    %81 = tpu.matmul %78, %79, %cst_23 {dimension_numbers = #tpu.dot_dimension_numbers<[2], [2], [1], [1], [0, 0, 0, 1, 1, 1], [0], [0]>} : vector<2x8x8xf32>, vector<2x8x8xf32>, vector<2x8x8xf32> -> vector<2x8x8xf32>
    "tpu.trace_stop"() : () -> ()
    %82 = arith.addf %81, %9 : vector<2x8x8xf32>
    %cst_24 = arith.constant dense<0xFF800000> : vector<2x8xf32>
    %83 = vector.multi_reduction <maximumf>, %82, %cst_24 [2] : vector<2x8x8xf32> to vector<2x8xf32>
    %84 = vector.shape_cast %83 : vector<2x8xf32> to vector<2x8x1xf32>
    %85 = vector.broadcast %84 : vector<2x8x1xf32> to vector<2x8x8xf32>
    %86 = arith.subf %82, %85 : vector<2x8x8xf32>
    %87 = math.exp %86 : vector<2x8x8xf32>
    %cst_25 = arith.constant dense<0.000000e+00> : vector<2x8xf32>
    %88 = vector.multi_reduction <add>, %87, %cst_25 [2] : vector<2x8x8xf32> to vector<2x8xf32>
    %89 = vector.shape_cast %88 : vector<2x8xf32> to vector<2x8x1xf32>
    %90 = vector.broadcast %89 : vector<2x8x1xf32> to vector<2x8x8xf32>
    %91 = arith.divf %87, %90 : vector<2x8x8xf32>
    "tpu.trace_start"() <{level = 10 : i32, message = "bqk,bkd->bqd"}> : () -> ()
    %cst_26 = arith.constant dense<0.000000e+00> : vector<2x8x8xf32>
    %92 = tpu.matmul %91, %80, %cst_26 {dimension_numbers = #tpu.dot_dimension_numbers<[2], [1], [1], [2], [0, 0, 0, 1, 1, 2], [0], [0]>} : vector<2x8x8xf32>, vector<2x8x8xf32>, vector<2x8x8xf32> -> vector<2x8x8xf32>
    "tpu.trace_stop"() : () -> ()
    %93 = vector.shape_cast %92 : vector<2x8x8xf32> to vector<16x8xf32>
    %94 = tpu.concatenate %30, %51, %72, %93 in 1 : vector<16x8xf32>, vector<16x8xf32>, vector<16x8xf32>, vector<16x8xf32> -> vector<16x32xf32>
    %c0_27 = arith.constant 0 : index
    %c0_28 = arith.constant 0 : index
    %95 = vector.load %arg3[%c0_27, %c0_28] : memref<32x32xf32, #tpu.memory_space<vmem>>, vector<32x32xf32>
    %cst_29 = arith.constant dense<0.000000e+00> : vector<16x32xf32>
    %96 = tpu.matmul %94, %95, %cst_29 {dimension_numbers = #tpu.dot_dimension_numbers<[1], [0], [0], [1], [0, 0, 1, 1], [], []>} : vector<16x32xf32>, vector<32x32xf32>, vector<16x32xf32> -> vector<16x32xf32>
    %c0_30 = arith.constant 0 : index
    %c0_31 = arith.constant 0 : index
    %97 = vector.load %arg4[%c0_30, %c0_31] : memref<1x32xf32, #tpu.memory_space<vmem>>, vector<1x32xf32>
    %98 = vector.broadcast %97 : vector<1x32xf32> to vector<16x32xf32>
    %99 = arith.addf %96, %98 : vector<16x32xf32>
    %c0_32 = arith.constant 0 : index
    %c0_33 = arith.constant 0 : index
    %100 = vector.load %arg6[%c0_32, %c0_33] : memref<16x32xf32, #tpu.memory_space<vmem>>, vector<16x32xf32>
    tpu.vector_store %arg6[%c0_32, %c0_33], %99 {strides = array<i32>} : memref<16x32xf32, #tpu.memory_space<vmem>>, vector<16x32xf32>,
    return
  }
}

</mosaic_0001>

<llo_original>
// kernel: tpu_custom_call.1
$region0: #{tpu_custom_call.1}
  #allocation0 [shape = 'u32[]', space=smem, size = 0x4, offset = 0x4, fixed_abs, tag = 'smem constant byte address 0x4 - core index']
  #allocation1 [shape = 'u32[144,128]{1,0:T(1,128)}', space=vmem, size = 0x12000, scoped, tag = 'internal scratch']
  %s0 = inlined_call_operand.hbm [shape: f32[16,32], index: 0, kind: input, shape index: {}]
  %s1 = inlined_call_operand.hbm [shape: f32[32,96], index: 1, kind: input, shape index: {}]
  %s2 = inlined_call_operand.vmem [shape: f32[1,96], index: 2, kind: input, shape index: {}]
  %s3 = inlined_call_operand.hbm [shape: f32[32,32], index: 3, kind: input, shape index: {}]
  %s4 = inlined_call_operand.vmem [shape: f32[1,32], index: 4, kind: input, shape index: {}]
  %s5 = inlined_call_operand.vmem [shape: f32[8,8], index: 5, kind: input, shape index: {}]
  %s6 = inlined_call_operand.hbm [shape: f32[16,32], index: 6, kind: output, shape index: {}]
  %s7 = sld [smem:[#allocation0]]
  $region46: #{tpu_custom_call.1} parent=0
    _
  %s9 = ssub.s32 1, %s7
  %s10 = scalar_select 0, %s9, %s7
  $region1: #{tpu_custom_call.1} parent=0
    #allocation2 [shape = 'u8[8192]{0}', space=vmem, size = 0x2000, scoped, tag = 'input window, operand 0, single buffered']
    #allocation3 [shape = 's32[1]{0}', space=sflag, size = 0x4, scoped, tag = 'scoped memory for tpu_custom_call.1']
    #allocation4 [shape = 's32[1]{0}', space=sflag, size = 0x4, scoped, tag = 'scoped memory for tpu_custom_call.1']
    #allocation5 [shape = 'u8[16384]{0}', space=vmem, size = 0x4000, scoped, tag = 'input window, operand 1, single buffered']
    #allocation6 [shape = 's32[1]{0}', space=sflag, size = 0x4, scoped, tag = 'scoped memory for tpu_custom_call.1']
    #allocation7 [shape = 'u8[16384]{0}', space=vmem, size = 0x4000, scoped, tag = 'input window, operand 3, single buffered']
    #allocation8 [shape = 'u8[8192]{0}', space=vmem, size = 0x2000, scoped, tag = 'output window, operand 0, single buffered']
    %11 = vsyncpa [#allocation3], 0
    %12 = vsyncpa [#allocation6], 0
    %13 = vsyncpa [#allocation4], 0
    // Predicated region
    $region2: #{tpu_custom_call.1} parent=1 // pred_check
      _
    $region3: #{tpu_custom_call.1} parent=1 // pred_check_branch
      %15 = sbr.rel (0) target = $region5
    $region4: #{tpu_custom_call.1} parent=1 // pred_region
      %s17 = ssub.s32 256, 256
      %18 = vsyncadd [#allocation3], %s17
      %s19 = sshll.u32 [#allocation2], 4
      %s20 = int_to_ptr.vmem [resolvable:$true] %s19
      %25 = dma.hbm_to_vmem [thread:$0]  %s0, 256, %s20, [#allocation3], 128, 128, 8
    $region5: #{tpu_custom_call.1} parent=1 // pred_fallthru
      _
    // Predicated region
    $region6: #{tpu_custom_call.1} parent=1 // pred_check
      _
    $region7: #{tpu_custom_call.1} parent=1 // pred_check_branch
      %27 = sbr.rel (0) target = $region9
    $region8: #{tpu_custom_call.1} parent=1 // pred_region
      %s29 = ssub.s32 512, 512
      %30 = vsyncadd [#allocation6], %s29
      %s31 = sshll.u32 [#allocation5], 4
      %s32 = int_to_ptr.vmem [resolvable:$true] %s31
      %37 = dma.hbm_to_vmem [thread:$0]  %s1, 512, %s32, [#allocation6], 128, 128, 8
    $region9: #{tpu_custom_call.1} parent=1 // pred_fallthru
      _
    // Predicated region
    $region10: #{tpu_custom_call.1} parent=1 // pred_check
      _
    $region11: #{tpu_custom_call.1} parent=1 // pred_check_branch
      %39 = sbr.rel (0) target = $region13
    $region12: #{tpu_custom_call.1} parent=1 // pred_region
      _
    $region13: #{tpu_custom_call.1} parent=1 // pred_fallthru
      _
    // Predicated region
    $region14: #{tpu_custom_call.1} parent=1 // pred_check
      _
    $region15: #{tpu_custom_call.1} parent=1 // pred_check_branch
      %41 = sbr.rel (0) target = $region17
    $region16: #{tpu_custom_call.1} parent=1 // pred_region
      %s43 = ssub.s32 512, 512
      %44 = vsyncadd [#allocation6], %s43
      %s45 = sshll.u32 [#allocation7], 4
      %s46 = int_to_ptr.vmem [resolvable:$true] %s45
      %51 = dma.hbm_to_vmem [thread:$0]  %s3, 512, %s46, [#allocation6], 128, 128, 8
    $region17: #{tpu_custom_call.1} parent=1 // pred_fallthru
      _
    // Predicated region
    $region18: #{tpu_custom_call.1} parent=1 // pred_check
      _
    $region19: #{tpu_custom_call.1} parent=1 // pred_check_branch
      %53 = sbr.rel (0) target = $region21
    $region20: #{tpu_custom_call.1} parent=1 // pred_region
      _
    $region21: #{tpu_custom_call.1} parent=1 // pred_fallthru
      _
    // Predicated region
    $region22: #{tpu_custom_call.1} parent=1 // pred_check
      _
    $region23: #{tpu_custom_call.1} parent=1 // pred_check_branch
      %55 = sbr.rel (0) target = $region25
    $region24: #{tpu_custom_call.1} parent=1 // pred_region
      _
    $region25: #{tpu_custom_call.1} parent=1 // pred_fallthru
      _
    // Predicated region
    $region26: #{tpu_custom_call.1} parent=1 // pred_check
      _
    $region27: #{tpu_custom_call.1} parent=1 // pred_check_branch
      %57 = sbr.rel (0) target = $region29
    $region28: #{tpu_custom_call.1} parent=1 // pred_region
      %58 = dma.done [#allocation3], 256
    $region29: #{tpu_custom_call.1} parent=1 // pred_fallthru
      _
    // Predicated region
    $region30: #{tpu_custom_call.1} parent=1 // pred_check
      _
    $region31: #{tpu_custom_call.1} parent=1 // pred_check_branch
      %60 = sbr.rel (0) target = $region33
    $region32: #{tpu_custom_call.1} parent=1 // pred_region
      %61 = dma.done [#allocation6], 512
    $region33: #{tpu_custom_call.1} parent=1 // pred_fallthru
      _
    // Predicated region
    $region34: #{tpu_custom_call.1} parent=1 // pred_check
      _
    $region35: #{tpu_custom_call.1} parent=1 // pred_check_branch
      %63 = sbr.rel (0) target = $region37
    $region36: #{tpu_custom_call.1} parent=1 // pred_region
      %64 = dma.done [#allocation6], 512
    $region37: #{tpu_custom_call.1} parent=1 // pred_fallthru
      _
    %v65 = vld [vmem:[#allocation2] sm:$0xff]
    %v66 = vld [vmem:[#allocation2 + $0x8] sm:$0xff]
    %v67 = vld [vmem:[#allocation5] sm:$0xff]
    %v68 = vld [vmem:[#allocation5 + $0x8] sm:$0xff]
    %v69 = vld [vmem:[#allocation5 + $0x10] sm:$0xff]
    %v70 = vld [vmem:[#allocation5 + $0x18] sm:$0xff]
    %v71 = vld [vmem:[%s2] sm:$0x1]
    %v73 = vlaneseq
    %v74 = vshrl.u32 %v73, 7
    %v75 = vsub.s32 0, %v74
    %v76 = vrot.slane %v71, %v75
    %vm78 = vcmask 261120
    %v80 = vsel %vm78, %v65, 0
    %v83 = vsel %vm78, %v66, 0
    %85 = vmatprep.subr.mxu0 0.0
    %86 = vmatpush1.msra.mxu0 %v67
    %87 = vmatprep.subr.mxu0 0.0
    %88 = vmatpush1.msra.mxu0 %v68
    %89 = vmatprep.subr.mxu0 0.0
    %90 = vmatpush1.msra.mxu0 %v69
    %91 = vmatprep.subr.mxu0 0.0
    %92 = vmatpush1.msra.mxu0 %v70
    %93 = vmatprep.subr.mxu0 0.0
    %94 = vmatpush1.msra.mxu0 0.0
    %95 = vmatprep.subr.mxu0 0.0
    %96 = vmatpush1.msra.mxu0 0.0
    %97 = vmatprep.subr.mxu0 0.0
    %98 = vmatpush1.msra.mxu0 0.0
    %99 = vmatprep.subr.mxu0 0.0
    %100 = vmatpush1.msra.mxu0 0.0
    %101 = vmatprep.subr.mxu0 0.0
    %102 = vmatpush1.msra.mxu0 0.0
    %103 = vmatprep.subr.mxu0 0.0
    %104 = vmatpush1.msra.mxu0 0.0
    %105 = vmatprep.subr.mxu0 0.0
    %106 = vmatpush1.msra.mxu0 0.0
    %107 = vmatprep.subr.mxu0 0.0
    %108 = vmatpush1.msra.mxu0 0.0
    %109 = vmatprep.subr.mxu0 0.0
    %110 = vmatpush1.msra.mxu0 0.0
    %111 = vmatprep.subr.mxu0 0.0
    %112 = vmatpush1.msra.mxu0 0.0
    %113 = vmatprep.subr.mxu0 0.0
    %114 = vmatpush1.msra.mxu0 0.0
    %115 = vmatprep.subr.mxu0 0.0
    %116 = vmatpush1.msra.mxu0 0.0
    %117 = vmatprep.subr.mxu0 0.0
    %118 = vmatpush1.msra.mxu0 0.0
    %119 = vmatprep.subr.mxu0 0.0
    %120 = vmatpush1.msra.mxu0 0.0
    %121 = vmatprep.subr.mxu0 0.0
    %122 = vmatpush1.msra.mxu0 0.0
    %123 = vmatprep.subr.mxu0 0.0
    %124 = vmatpush1.msra.mxu0 0.0
    %125 = vmatprep.subr.mxu0 0.0
    %126 = vmatpush1.msra.mxu0 0.0
    %127 = vmatprep.subr.mxu0 0.0
    %128 = vmatpush1.msra.mxu0 0.0
    %129 = vmatprep.subr.mxu0 0.0
    %130 = vmatpush1.msra.mxu0 0.0
    %131 = vmatprep.subr.mxu0 0.0
    %132 = vmatpush1.msra.mxu0 0.0
    %133 = vmatprep.subr.mxu0 0.0
    %134 = vmatpush1.msra.mxu0 0.0
    %135 = vmatprep.subr.mxu0 0.0
    %136 = vmatpush1.msra.mxu0 0.0
    %137 = vmatprep.subr.mxu0 0.0
    %138 = vmatpush1.msra.mxu0 0.0
    %139 = vmatprep.subr.mxu0 0.0
    %140 = vmatpush1.msra.mxu0 0.0
    %141 = vmatprep.subr.mxu0 0.0
    %142 = vmatpush1.msra.mxu0 0.0
    %143 = vmatprep.subr.mxu0 0.0
    %144 = vmatpush1.msra.mxu0 0.0
    %145 = vmatprep.subr.mxu0 0.0
    %146 = vmatpush1.msra.mxu0 0.0
    %147 = vmatprep.subr.mxu0 0.0
    %148 = vmatpush1.msra.mxu0 0.0
    %149 = vmatprep.mubr.f32.mxu0 0.0
    %150 = vmatmul.mubr.f32.gmra.mrb[0].mxu0 %v80
    %v151 = vpop.f32.mrb[0].mxu0
    %v152 = vadd.f32 %v76, %v151
    %v153 = vpop.f32.mrb[0].mxu0
    %154 = vmatprep.mubr.f32.mxu0 0.0
    %155 = vmatmul.mubr.f32.gmra.mrb[0].mxu0 %v83
    %v156 = vpop.f32.mrb[0].mxu0
    %v157 = vadd.f32 %v76, %v156
    %v158 = vpop.f32.mrb[0].mxu0
    %159 = vdwg.mxu0
    %v160 = vld [vmem:[%s5] sm:$0xff]
    %v161 = vmul.f32 %v152, 0.35355338
    %v162 = vmul.f32 %v157, 0.35355338
    %164 = vrot.lane.b32.xlu0 %v152, 96
    %v165 = vpop.permute.xlu0 %164
    %vm166 = vcmask 64512
    %v168 = vsel %vm166, %v161, 0
    %v170 = vsel %vm166, %v165, 0
    %172 = vmatprep.subr.mxu0 0.0
    %173 = vmatpush1.xpose.msra.mxu0 %v170
    %174 = vmatprep.subr.mxu0 0.0
    %175 = vmatpush1.xpose.msra.mxu0 0.0
    %176 = vmatprep.subr.mxu0 0.0
    %177 = vmatpush1.xpose.msra.mxu0 0.0
    %178 = vmatprep.subr.mxu0 0.0
    %179 = vmatpush1.xpose.msra.mxu0 0.0
    %180 = vmatprep.subr.mxu0 0.0
    %181 = vmatpush1.xpose.msra.mxu0 0.0
    %182 = vmatprep.subr.mxu0 0.0
    %183 = vmatpush1.xpose.msra.mxu0 0.0
    %184 = vmatprep.subr.mxu0 0.0
    %185 = vmatpush1.xpose.msra.mxu0 0.0
    %186 = vmatprep.subr.mxu0 0.0
    %187 = vmatpush1.xpose.msra.mxu0 0.0
    %188 = vmatprep.subr.mxu0 0.0
    %189 = vmatpush1.xpose.msra.mxu0 0.0
    %190 = vmatprep.subr.mxu0 0.0
    %191 = vmatpush1.xpose.msra.mxu0 0.0
    %192 = vmatprep.subr.mxu0 0.0
    %193 = vmatpush1.xpose.msra.mxu0 0.0
    %194 = vmatprep.subr.mxu0 0.0
    %195 = vmatpush1.xpose.msra.mxu0 0.0
    %196 = vmatprep.subr.mxu0 0.0
    %197 = vmatpush1.xpose.msra.mxu0 0.0
    %198 = vmatprep.subr.mxu0 0.0
    %199 = vmatpush1.xpose.msra.mxu0 0.0
    %200 = vmatprep.subr.mxu0 0.0
    %201 = vmatpush1.xpose.msra.mxu0 0.0
    %202 = vmatprep.subr.mxu0 0.0
    %203 = vmatpush1.xpose.msra.mxu0 0.0
    %204 = vmatprep.subr.mxu0 0.0
    %205 = vmatpush1.xpose.msra.mxu0 0.0
    %206 = vmatprep.subr.mxu0 0.0
    %207 = vmatpush1.xpose.msra.mxu0 0.0
    %208 = vmatprep.subr.mxu0 0.0
    %209 = vmatpush1.xpose.msra.mxu0 0.0
    %210 = vmatprep.subr.mxu0 0.0
    %211 = vmatpush1.xpose.msra.mxu0 0.0
    %212 = vmatprep.subr.mxu0 0.0
    %213 = vmatpush1.xpose.msra.mxu0 0.0
    %214 = vmatprep.subr.mxu0 0.0
    %215 = vmatpush1.xpose.msra.mxu0 0.0
    %216 = vmatprep.subr.mxu0 0.0
    %217 = vmatpush1.xpose.msra.mxu0 0.0
    %218 = vmatprep.subr.mxu0 0.0
    %219 = vmatpush1.xpose.msra.mxu0 0.0
    %220 = vmatprep.subr.mxu0 0.0
    %221 = vmatpush1.xpose.msra.mxu0 0.0
    %222 = vmatprep.subr.mxu0 0.0
    %223 = vmatpush1.xpose.msra.mxu0 0.0
    %224 = vmatprep.subr.mxu0 0.0
    %225 = vmatpush1.xpose.msra.mxu0 0.0
    %226 = vmatprep.subr.mxu0 0.0
    %227 = vmatpush1.xpose.msra.mxu0 0.0
    %228 = vmatprep.subr.mxu0 0.0
    %229 = vmatpush1.xpose.msra.mxu0 0.0
    %230 = vmatprep.subr.mxu0 0.0
    %231 = vmatpush1.xpose.msra.mxu0 0.0
    %232 = vmatprep.subr.mxu0 0.0
    %233 = vmatpush1.xpose.msra.mxu0 0.0
    %234 = vmatprep.subr.mxu0 0.0
    %235 = vmatpush1.xpose.msra.mxu0 0.0
    %236 = vmatprep.mubr.f32.mxu0 0.0
    %237 = vmatmul.mubr.f32.gmra.mrb[0].mxu0 %v168
    %v238 = vpop.f32.mrb[0].mxu0
    %v239 = vadd.f32 %v160, %v238
    %v240 = vpop.f32.mrb[0].mxu0
    %241 = vdwg.mxu0
    %243 = vrot.lane.b32.xlu0 %v157, 96
    %v244 = vpop.permute.xlu0 %243
    %v246 = vsel %vm166, %v162, 0
    %v248 = vsel %vm166, %v244, 0
    %250 = vmatprep.subr.mxu0 0.0
    %251 = vmatpush1.xpose.msra.mxu0 %v248
    %252 = vmatprep.subr.mxu0 0.0
    %253 = vmatpush1.xpose.msra.mxu0 0.0
    %254 = vmatprep.subr.mxu0 0.0
    %255 = vmatpush1.xpose.msra.mxu0 0.0
    %256 = vmatprep.subr.mxu0 0.0
    %257 = vmatpush1.xpose.msra.mxu0 0.0
    %258 = vmatprep.subr.mxu0 0.0
    %259 = vmatpush1.xpose.msra.mxu0 0.0
    %260 = vmatprep.subr.mxu0 0.0
    %261 = vmatpush1.xpose.msra.mxu0 0.0
    %262 = vmatprep.subr.mxu0 0.0
    %263 = vmatpush1.xpose.msra.mxu0 0.0
    %264 = vmatprep.subr.mxu0 0.0
    %265 = vmatpush1.xpose.msra.mxu0 0.0
    %266 = vmatprep.subr.mxu0 0.0
    %267 = vmatpush1.xpose.msra.mxu0 0.0
    %268 = vmatprep.subr.mxu0 0.0
    %269 = vmatpush1.xpose.msra.mxu0 0.0
    %270 = vmatprep.subr.mxu0 0.0
    %271 = vmatpush1.xpose.msra.mxu0 0.0
    %272 = vmatprep.subr.mxu0 0.0
    %273 = vmatpush1.xpose.msra.mxu0 0.0
    %274 = vmatprep.subr.mxu0 0.0
    %275 = vmatpush1.xpose.msra.mxu0 0.0
    %276 = vmatprep.subr.mxu0 0.0
    %277 = vmatpush1.xpose.msra.mxu0 0.0
    %278 = vmatprep.subr.mxu0 0.0
    %279 = vmatpush1.xpose.msra.mxu0 0.0
    %280 = vmatprep.subr.mxu0 0.0
    %281 = vmatpush1.xpose.msra.mxu0 0.0
    %282 = vmatprep.subr.mxu0 0.0
    %283 = vmatpush1.xpose.msra.mxu0 0.0
    %284 = vmatprep.subr.mxu0 0.0
    %285 = vmatpush1.xpose.msra.mxu0 0.0
    %286 = vmatprep.subr.mxu0 0.0
    %287 = vmatpush1.xpose.msra.mxu0 0.0
    %288 = vmatprep.subr.mxu0 0.0
    %289 = vmatpush1.xpose.msra.mxu0 0.0
    %290 = vmatprep.subr.mxu0 0.0
    %291 = vmatpush1.xpose.msra.mxu0 0.0
    %292 = vmatprep.subr.mxu0 0.0
    %293 = vmatpush1.xpose.msra.mxu0 0.0
    %294 = vmatprep.subr.mxu0 0.0
    %295 = vmatpush1.xpose.msra.mxu0 0.0
    %296 = vmatprep.subr.mxu0 0.0
    %297 = vmatpush1.xpose.msra.mxu0 0.0
    %298 = vmatprep.subr.mxu0 0.0
    %299 = vmatpush1.xpose.msra.mxu0 0.0
    %300 = vmatprep.subr.mxu0 0.0
    %301 = vmatpush1.xpose.msra.mxu0 0.0
    %302 = vmatprep.subr.mxu0 0.0
    %303 = vmatpush1.xpose.msra.mxu0 0.0
    %304 = vmatprep.subr.mxu0 0.0
    %305 = vmatpush1.xpose.msra.mxu0 0.0
    %306 = vmatprep.subr.mxu0 0.0
    %307 = vmatpush1.xpose.msra.mxu0 0.0
    %308 = vmatprep.subr.mxu0 0.0
    %309 = vmatpush1.xpose.msra.mxu0 0.0
    %310 = vmatprep.subr.mxu0 0.0
    %311 = vmatpush1.xpose.msra.mxu0 0.0
    %312 = vmatprep.subr.mxu0 0.0
    %313 = vmatpush1.xpose.msra.mxu0 0.0
    %314 = vmatprep.mubr.f32.mxu0 0.0
    %315 = vmatmul.mubr.f32.gmra.mrb[0].mxu0 %v246
    %v316 = vpop.f32.mrb[0].mxu0
    %v317 = vadd.f32 %v160, %v316
    %v318 = vpop.f32.mrb[0].mxu0
    %319 = vdwg.mxu0
    %v320 = vsel %vm166, %v239, -inf
    %321 = vmax.xlane.f32.xlu0 %v320
    %v322 = vpop.xlane.xlu0 %321
    %v323 = vsel %vm166, %v317, -inf
    %324 = vmax.xlane.f32.xlu0 %v323
    %v325 = vpop.xlane.xlu0 %324
    %v326 = vsub.f32 %v239, %v322
    %v327 = vsub.f32 %v317, %v325
    %v328 = vmul.f32 %v326, 1.442695
    %v329 = vpow.pop %v328
    %v330 = vmul.f32 %v327, 1.442695
    %v331 = vpow.pop %v330
    %v332 = vsel %vm166, %v329, 0.0
    %333 = vadd.xlane.f32.xlu0 %v332
    %v334 = vpop.xlane.xlu0 %333
    %v335 = vsel %vm166, %v331, 0.0
    %336 = vadd.xlane.f32.xlu0 %v335
    %v337 = vpop.xlane.xlu0 %336
    %v338 = vrcp.pop %v334
    %v339 = vmul.f32 %v329, %v338
    %v340 = vrcp.pop %v337
    %v341 = vmul.f32 %v331, %v340
    %342 = vrot.lane.b32.xlu0 %v152, 64
    %v343 = vpop.permute.xlu0 %342
    %v346 = vsel %vm166, %v339, 0
    %348 = vmatprep.subr.mxu0 0.0
    %349 = vmatpush1.msra.mxu0 %v343
    %350 = vmatprep.subr.mxu0 0.0
    %351 = vmatpush1.msra.mxu0 0.0
    %352 = vmatprep.subr.mxu0 0.0
    %353 = vmatpush1.msra.mxu0 0.0
    %354 = vmatprep.subr.mxu0 0.0
    %355 = vmatpush1.msra.mxu0 0.0
    %356 = vmatprep.subr.mxu0 0.0
    %357 = vmatpush1.msra.mxu0 0.0
    %358 = vmatprep.subr.mxu0 0.0
    %359 = vmatpush1.msra.mxu0 0.0
    %360 = vmatprep.subr.mxu0 0.0
    %361 = vmatpush1.msra.mxu0 0.0
    %362 = vmatprep.subr.mxu0 0.0
    %363 = vmatpush1.msra.mxu0 0.0
    %364 = vmatprep.subr.mxu0 0.0
    %365 = vmatpush1.msra.mxu0 0.0
    %366 = vmatprep.subr.mxu0 0.0
    %367 = vmatpush1.msra.mxu0 0.0
    %368 = vmatprep.subr.mxu0 0.0
    %369 = vmatpush1.msra.mxu0 0.0
    %370 = vmatprep.subr.mxu0 0.0
    %371 = vmatpush1.msra.mxu0 0.0
    %372 = vmatprep.subr.mxu0 0.0
    %373 = vmatpush1.msra.mxu0 0.0
    %374 = vmatprep.subr.mxu0 0.0
    %375 = vmatpush1.msra.mxu0 0.0
    %376 = vmatprep.subr.mxu0 0.0
    %377 = vmatpush1.msra.mxu0 0.0
    %378 = vmatprep.subr.mxu0 0.0
    %379 = vmatpush1.msra.mxu0 0.0
    %380 = vmatprep.subr.mxu0 0.0
    %381 = vmatpush1.msra.mxu0 0.0
    %382 = vmatprep.subr.mxu0 0.0
    %383 = vmatpush1.msra.mxu0 0.0
    %384 = vmatprep.subr.mxu0 0.0
    %385 = vmatpush1.msra.mxu0 0.0
    %386 = vmatprep.subr.mxu0 0.0
    %387 = vmatpush1.msra.mxu0 0.0
    %388 = vmatprep.subr.mxu0 0.0
    %389 = vmatpush1.msra.mxu0 0.0
    %390 = vmatprep.subr.mxu0 0.0
    %391 = vmatpush1.msra.mxu0 0.0
    %392 = vmatprep.subr.mxu0 0.0
    %393 = vmatpush1.msra.mxu0 0.0
    %394 = vmatprep.subr.mxu0 0.0
    %395 = vmatpush1.msra.mxu0 0.0
    %396 = vmatprep.subr.mxu0 0.0
    %397 = vmatpush1.msra.mxu0 0.0
    %398 = vmatprep.subr.mxu0 0.0
    %399 = vmatpush1.msra.mxu0 0.0
    %400 = vmatprep.subr.mxu0 0.0
    %401 = vmatpush1.msra.mxu0 0.0
    %402 = vmatprep.subr.mxu0 0.0
    %403 = vmatpush1.msra.mxu0 0.0
    %404 = vmatprep.subr.mxu0 0.0
    %405 = vmatpush1.msra.mxu0 0.0
    %406 = vmatprep.subr.mxu0 0.0
    %407 = vmatpush1.msra.mxu0 0.0
    %408 = vmatprep.subr.mxu0 0.0
    %409 = vmatpush1.msra.mxu0 0.0
    %410 = vmatprep.subr.mxu0 0.0
    %411 = vmatpush1.msra.mxu0 0.0
    %412 = vmatprep.mubr.f32.mxu0 0.0
    %413 = vmatmul.mubr.f32.gmra.mrb[0].mxu0 %v346
    %v414 = vpop.f32.mrb[0].mxu0
    %v415 = vadd.f32 0.0, %v414
    %v416 = vpop.f32.mrb[0].mxu0
    %417 = vdwg.mxu0
    %418 = vrot.lane.b32.xlu0 %v157, 64
    %v419 = vpop.permute.xlu0 %418
    %v422 = vsel %vm166, %v341, 0
    %424 = vmatprep.subr.mxu0 0.0
    %425 = vmatpush1.msra.mxu0 %v419
    %426 = vmatprep.subr.mxu0 0.0
    %427 = vmatpush1.msra.mxu0 0.0
    %428 = vmatprep.subr.mxu0 0.0
    %429 = vmatpush1.msra.mxu0 0.0
    %430 = vmatprep.subr.mxu0 0.0
    %431 = vmatpush1.msra.mxu0 0.0
    %432 = vmatprep.subr.mxu0 0.0
    %433 = vmatpush1.msra.mxu0 0.0
    %434 = vmatprep.subr.mxu0 0.0
    %435 = vmatpush1.msra.mxu0 0.0
    %436 = vmatprep.subr.mxu0 0.0
    %437 = vmatpush1.msra.mxu0 0.0
    %438 = vmatprep.subr.mxu0 0.0
    %439 = vmatpush1.msra.mxu0 0.0
    %440 = vmatprep.subr.mxu0 0.0
    %441 = vmatpush1.msra.mxu0 0.0
    %442 = vmatprep.subr.mxu0 0.0
    %443 = vmatpush1.msra.mxu0 0.0
    %444 = vmatprep.subr.mxu0 0.0
    %445 = vmatpush1.msra.mxu0 0.0
    %446 = vmatprep.subr.mxu0 0.0
    %447 = vmatpush1.msra.mxu0 0.0
    %448 = vmatprep.subr.mxu0 0.0
    %449 = vmatpush1.msra.mxu0 0.0
    %450 = vmatprep.subr.mxu0 0.0
    %451 = vmatpush1.msra.mxu0 0.0
    %452 = vmatprep.subr.mxu0 0.0
    %453 = vmatpush1.msra.mxu0 0.0
    %454 = vmatprep.subr.mxu0 0.0
    %455 = vmatpush1.msra.mxu0 0.0
    %456 = vmatprep.subr.mxu0 0.0
    %457 = vmatpush1.msra.mxu0 0.0
    %458 = vmatprep.subr.mxu0 0.0
    %459 = vmatpush1.msra.mxu0 0.0
    %460 = vmatprep.subr.mxu0 0.0
    %461 = vmatpush1.msra.mxu0 0.0
    %462 = vmatprep.subr.mxu0 0.0
    %463 = vmatpush1.msra.mxu0 0.0
    %464 = vmatprep.subr.mxu0 0.0
    %465 = vmatpush1.msra.mxu0 0.0
    %466 = vmatprep.subr.mxu0 0.0
    %467 = vmatpush1.msra.mxu0 0.0
    %468 = vmatprep.subr.mxu0 0.0
    %469 = vmatpush1.msra.mxu0 0.0
    %470 = vmatprep.subr.mxu0 0.0
    %471 = vmatpush1.msra.mxu0 0.0
    %472 = vmatprep.subr.mxu0 0.0
    %473 = vmatpush1.msra.mxu0 0.0
    %474 = vmatprep.subr.mxu0 0.0
    %475 = vmatpush1.msra.mxu0 0.0
    %476 = vmatprep.subr.mxu0 0.0
    %477 = vmatpush1.msra.mxu0 0.0
    %478 = vmatprep.subr.mxu0 0.0
    %479 = vmatpush1.msra.mxu0 0.0
    %480 = vmatprep.subr.mxu0 0.0
    %481 = vmatpush1.msra.mxu0 0.0
    %482 = vmatprep.subr.mxu0 0.0
    %483 = vmatpush1.msra.mxu0 0.0
    %484 = vmatprep.subr.mxu0 0.0
    %485 = vmatpush1.msra.mxu0 0.0
    %486 = vmatprep.subr.mxu0 0.0
    %487 = vmatpush1.msra.mxu0 0.0
    %488 = vmatprep.mubr.f32.mxu0 0.0
    %489 = vmatmul.mubr.f32.gmra.mrb[0].mxu0 %v422
    %v490 = vpop.f32.mrb[0].mxu0
    %v491 = vadd.f32 0.0, %v490
    %v492 = vpop.f32.mrb[0].mxu0
    %493 = vdwg.mxu0
    %494 = vrot.lane.b32.xlu0 %v161, 120
    %v495 = vpop.permute.xlu0 %494
    %496 = vrot.lane.b32.xlu0 %v152, 88
    %v497 = vpop.permute.xlu0 %496
    %v498 = vsel %vm166, %v495, 0
    %v500 = vsel %vm166, %v497, 0
    %502 = vmatprep.subr.mxu0 0.0
    %503 = vmatpush1.xpose.msra.mxu0 %v500
    %504 = vmatprep.subr.mxu0 0.0
    %505 = vmatpush1.xpose.msra.mxu0 0.0
    %506 = vmatprep.subr.mxu0 0.0
    %507 = vmatpush1.xpose.msra.mxu0 0.0
    %508 = vmatprep.subr.mxu0 0.0
    %509 = vmatpush1.xpose.msra.mxu0 0.0
    %510 = vmatprep.subr.mxu0 0.0
    %511 = vmatpush1.xpose.msra.mxu0 0.0
    %512 = vmatprep.subr.mxu0 0.0
    %513 = vmatpush1.xpose.msra.mxu0 0.0
    %514 = vmatprep.subr.mxu0 0.0
    %515 = vmatpush1.xpose.msra.mxu0 0.0
    %516 = vmatprep.subr.mxu0 0.0
    %517 = vmatpush1.xpose.msra.mxu0 0.0
    %518 = vmatprep.subr.mxu0 0.0
    %519 = vmatpush1.xpose.msra.mxu0 0.0
    %520 = vmatprep.subr.mxu0 0.0
    %521 = vmatpush1.xpose.msra.mxu0 0.0
    %522 = vmatprep.subr.mxu0 0.0
    %523 = vmatpush1.xpose.msra.mxu0 0.0
    %524 = vmatprep.subr.mxu0 0.0
    %525 = vmatpush1.xpose.msra.mxu0 0.0
    %526 = vmatprep.subr.mxu0 0.0
    %527 = vmatpush1.xpose.msra.mxu0 0.0
    %528 = vmatprep.subr.mxu0 0.0
    %529 = vmatpush1.xpose.msra.mxu0 0.0
    %530 = vmatprep.subr.mxu0 0.0
    %531 = vmatpush1.xpose.msra.mxu0 0.0
    %532 = vmatprep.subr.mxu0 0.0
    %533 = vmatpush1.xpose.msra.mxu0 0.0
    %534 = vmatprep.subr.mxu0 0.0
    %535 = vmatpush1.xpose.msra.mxu0 0.0
    %536 = vmatprep.subr.mxu0 0.0
    %537 = vmatpush1.xpose.msra.mxu0 0.0
    %538 = vmatprep.subr.mxu0 0.0
    %539 = vmatpush1.xpose.msra.mxu0 0.0
    %540 = vmatprep.subr.mxu0 0.0
    %541 = vmatpush1.xpose.msra.mxu0 0.0
    %542 = vmatprep.subr.mxu0 0.0
    %543 = vmatpush1.xpose.msra.mxu0 0.0
    %544 = vmatprep.subr.mxu0 0.0
    %545 = vmatpush1.xpose.msra.mxu0 0.0
    %546 = vmatprep.subr.mxu0 0.0
    %547 = vmatpush1.xpose.msra.mxu0 0.0
    %548 = vmatprep.subr.mxu0 0.0
    %549 = vmatpush1.xpose.msra.mxu0 0.0
    %550 = vmatprep.subr.mxu0 0.0
    %551 = vmatpush1.xpose.msra.mxu0 0.0
    %552 = vmatprep.subr.mxu0 0.0
    %553 = vmatpush1.xpose.msra.mxu0 0.0
    %554 = vmatprep.subr.mxu0 0.0
    %555 = vmatpush1.xpose.msra.mxu0 0.0
    %556 = vmatprep.subr.mxu0 0.0
    %557 = vmatpush1.xpose.msra.mxu0 0.0
    %558 = vmatprep.subr.mxu0 0.0
    %559 = vmatpush1.xpose.msra.mxu0 0.0
    %560 = vmatprep.subr.mxu0 0.0
    %561 = vmatpush1.xpose.msra.mxu0 0.0
    %562 = vmatprep.subr.mxu0 0.0
    %563 = vmatpush1.xpose.msra.mxu0 0.0
    %564 = vmatprep.subr.mxu0 0.0
    %565 = vmatpush1.xpose.msra.mxu0 0.0
    %566 = vmatprep.mubr.f32.mxu0 0.0
    %567 = vmatmul.mubr.f32.gmra.mrb[0].mxu0 %v498
    %v568 = vpop.f32.mrb[0].mxu0
    %v569 = vadd.f32 %v160, %v568
    %v570 = vpop.f32.mrb[0].mxu0
    %571 = vdwg.mxu0
    %572 = vrot.lane.b32.xlu0 %v162, 120
    %v573 = vpop.permute.xlu0 %572
    %574 = vrot.lane.b32.xlu0 %v157, 88
    %v575 = vpop.permute.xlu0 %574
    %v576 = vsel %vm166, %v573, 0
    %v578 = vsel %vm166, %v575, 0
    %580 = vmatprep.subr.mxu0 0.0
    %581 = vmatpush1.xpose.msra.mxu0 %v578
    %582 = vmatprep.subr.mxu0 0.0
    %583 = vmatpush1.xpose.msra.mxu0 0.0
    %584 = vmatprep.subr.mxu0 0.0
    %585 = vmatpush1.xpose.msra.mxu0 0.0
    %586 = vmatprep.subr.mxu0 0.0
    %587 = vmatpush1.xpose.msra.mxu0 0.0
    %588 = vmatprep.subr.mxu0 0.0
    %589 = vmatpush1.xpose.msra.mxu0 0.0
    %590 = vmatprep.subr.mxu0 0.0
    %591 = vmatpush1.xpose.msra.mxu0 0.0
    %592 = vmatprep.subr.mxu0 0.0
    %593 = vmatpush1.xpose.msra.mxu0 0.0
    %594 = vmatprep.subr.mxu0 0.0
    %595 = vmatpush1.xpose.msra.mxu0 0.0
    %596 = vmatprep.subr.mxu0 0.0
    %597 = vmatpush1.xpose.msra.mxu0 0.0
    %598 = vmatprep.subr.mxu0 0.0
    %599 = vmatpush1.xpose.msra.mxu0 0.0
    %600 = vmatprep.subr.mxu0 0.0
    %601 = vmatpush1.xpose.msra.mxu0 0.0
    %602 = vmatprep.subr.mxu0 0.0
    %603 = vmatpush1.xpose.msra.mxu0 0.0
    %604 = vmatprep.subr.mxu0 0.0
    %605 = vmatpush1.xpose.msra.mxu0 0.0
    %606 = vmatprep.subr.mxu0 0.0
    %607 = vmatpush1.xpose.msra.mxu0 0.0
    %608 = vmatprep.subr.mxu0 0.0
    %609 = vmatpush1.xpose.msra.mxu0 0.0
    %610 = vmatprep.subr.mxu0 0.0
    %611 = vmatpush1.xpose.msra.mxu0 0.0
    %612 = vmatprep.subr.mxu0 0.0
    %613 = vmatpush1.xpose.msra.mxu0 0.0
    %614 = vmatprep.subr.mxu0 0.0
    %615 = vmatpush1.xpose.msra.mxu0 0.0
    %616 = vmatprep.subr.mxu0 0.0
    %617 = vmatpush1.xpose.msra.mxu0 0.0
    %618 = vmatprep.subr.mxu0 0.0
    %619 = vmatpush1.xpose.msra.mxu0 0.0
    %620 = vmatprep.subr.mxu0 0.0
    %621 = vmatpush1.xpose.msra.mxu0 0.0
    %622 = vmatprep.subr.mxu0 0.0
    %623 = vmatpush1.xpose.msra.mxu0 0.0
    %624 = vmatprep.subr.mxu0 0.0
    %625 = vmatpush1.xpose.msra.mxu0 0.0
    %626 = vmatprep.subr.mxu0 0.0
    %627 = vmatpush1.xpose.msra.mxu0 0.0
    %628 = vmatprep.subr.mxu0 0.0
    %629 = vmatpush1.xpose.msra.mxu0 0.0
    %630 = vmatprep.subr.mxu0 0.0
    %631 = vmatpush1.xpose.msra.mxu0 0.0
    %632 = vmatprep.subr.mxu0 0.0
    %633 = vmatpush1.xpose.msra.mxu0 0.0
    %634 = vmatprep.subr.mxu0 0.0
    %635 = vmatpush1.xpose.msra.mxu0 0.0
    %636 = vmatprep.subr.mxu0 0.0
    %637 = vmatpush1.xpose.msra.mxu0 0.0
    %638 = vmatprep.subr.mxu0 0.0
    %639 = vmatpush1.xpose.msra.mxu0 0.0
    %640 = vmatprep.subr.mxu0 0.0
    %641 = vmatpush1.xpose.msra.mxu0 0.0
    %642 = vmatprep.subr.mxu0 0.0
    %643 = vmatpush1.xpose.msra.mxu0 0.0
    %644 = vmatprep.mubr.f32.mxu0 0.0
    %645 = vmatmul.mubr.f32.gmra.mrb[0].mxu0 %v576
    %v646 = vpop.f32.mrb[0].mxu0
    %v647 = vadd.f32 %v160, %v646
    %v648 = vpop.f32.mrb[0].mxu0
    %649 = vdwg.mxu0
    %v650 = vsel %vm166, %v569, -inf
    %651 = vmax.xlane.f32.xlu0 %v650
    %v652 = vpop.xlane.xlu0 %651
    %v653 = vsel %vm166, %v647, -inf
    %654 = vmax.xlane.f32.xlu0 %v653
    %v655 = vpop.xlane.xlu0 %654
    %v656 = vsub.f32 %v569, %v652
    %v657 = vsub.f32 %v647, %v655
    %v658 = vmul.f32 %v656, 1.442695
    %v659 = vpow.pop %v658
    %v660 = vmul.f32 %v657, 1.442695
    %v661 = vpow.pop %v660
    %v662 = vsel %vm166, %v659, 0.0
    %663 = vadd.xlane.f32.xlu0 %v662
    %v664 = vpop.xlane.xlu0 %663
    %v665 = vsel %vm166, %v661, 0.0
    %666 = vadd.xlane.f32.xlu0 %v665
    %v667 = vpop.xlane.xlu0 %666
    %v668 = vrcp.pop %v664
    %v669 = vmul.f32 %v659, %v668
    %v670 = vrcp.pop %v667
    %v671 = vmul.f32 %v661, %v670
    %672 = vrot.lane.b32.xlu0 %v152, 56
    %v673 = vpop.permute.xlu0 %672
    %v676 = vsel %vm166, %v669, 0
    %678 = vmatprep.subr.mxu0 0.0
    %679 = vmatpush1.msra.mxu0 %v673
    %680 = vmatprep.subr.mxu0 0.0
    %681 = vmatpush1.msra.mxu0 0.0
    %682 = vmatprep.subr.mxu0 0.0
    %683 = vmatpush1.msra.mxu0 0.0
    %684 = vmatprep.subr.mxu0 0.0
    %685 = vmatpush1.msra.mxu0 0.0
    %686 = vmatprep.subr.mxu0 0.0
    %687 = vmatpush1.msra.mxu0 0.0
    %688 = vmatprep.subr.mxu0 0.0
    %689 = vmatpush1.msra.mxu0 0.0
    %690 = vmatprep.subr.mxu0 0.0
    %691 = vmatpush1.msra.mxu0 0.0
    %692 = vmatprep.subr.mxu0 0.0
    %693 = vmatpush1.msra.mxu0 0.0
    %694 = vmatprep.subr.mxu0 0.0
    %695 = vmatpush1.msra.mxu0 0.0
    %696 = vmatprep.subr.mxu0 0.0
    %697 = vmatpush1.msra.mxu0 0.0
    %698 = vmatprep.subr.mxu0 0.0
    %699 = vmatpush1.msra.mxu0 0.0
    %700 = vmatprep.subr.mxu0 0.0
    %701 = vmatpush1.msra.mxu0 0.0
    %702 = vmatprep.subr.mxu0 0.0
    %703 = vmatpush1.msra.mxu0 0.0
    %704 = vmatprep.subr.mxu0 0.0
    %705 = vmatpush1.msra.mxu0 0.0
    %706 = vmatprep.subr.mxu0 0.0
    %707 = vmatpush1.msra.mxu0 0.0
    %708 = vmatprep.subr.mxu0 0.0
    %709 = vmatpush1.msra.mxu0 0.0
    %710 = vmatprep.subr.mxu0 0.0
    %711 = vmatpush1.msra.mxu0 0.0
    %712 = vmatprep.subr.mxu0 0.0
    %713 = vmatpush1.msra.mxu0 0.0
    %714 = vmatprep.subr.mxu0 0.0
    %715 = vmatpush1.msra.mxu0 0.0
    %716 = vmatprep.subr.mxu0 0.0
    %717 = vmatpush1.msra.mxu0 0.0
    %718 = vmatprep.subr.mxu0 0.0
    %719 = vmatpush1.msra.mxu0 0.0
    %720 = vmatprep.subr.mxu0 0.0
    %721 = vmatpush1.msra.mxu0 0.0
    %722 = vmatprep.subr.mxu0 0.0
    %723 = vmatpush1.msra.mxu0 0.0
    %724 = vmatprep.subr.mxu0 0.0
    %725 = vmatpush1.msra.mxu0 0.0
    %726 = vmatprep.subr.mxu0 0.0
    %727 = vmatpush1.msra.mxu0 0.0
    %728 = vmatprep.subr.mxu0 0.0
    %729 = vmatpush1.msra.mxu0 0.0
    %730 = vmatprep.subr.mxu0 0.0
    %731 = vmatpush1.msra.mxu0 0.0
    %732 = vmatprep.subr.mxu0 0.0
    %733 = vmatpush1.msra.mxu0 0.0
    %734 = vmatprep.subr.mxu0 0.0
    %735 = vmatpush1.msra.mxu0 0.0
    %736 = vmatprep.subr.mxu0 0.0
    %737 = vmatpush1.msra.mxu0 0.0
    %738 = vmatprep.subr.mxu0 0.0
    %739 = vmatpush1.msra.mxu0 0.0
    %740 = vmatprep.subr.mxu0 0.0
    %741 = vmatpush1.msra.mxu0 0.0
    %742 = vmatprep.mubr.f32.mxu0 0.0
    %743 = vmatmul.mubr.f32.gmra.mrb[0].mxu0 %v676
    %v744 = vpop.f32.mrb[0].mxu0
    %v745 = vadd.f32 0.0, %v744
    %v746 = vpop.f32.mrb[0].mxu0
    %747 = vdwg.mxu0
    %748 = vrot.lane.b32.xlu0 %v157, 56
    %v749 = vpop.permute.xlu0 %748
    %v752 = vsel %vm166, %v671, 0
    %754 = vmatprep.subr.mxu0 0.0
    %755 = vmatpush1.msra.mxu0 %v749
    %756 = vmatprep.subr.mxu0 0.0
    %757 = vmatpush1.msra.mxu0 0.0
    %758 = vmatprep.subr.mxu0 0.0
    %759 = vmatpush1.msra.mxu0 0.0
    %760 = vmatprep.subr.mxu0 0.0
    %761 = vmatpush1.msra.mxu0 0.0
    %762 = vmatprep.subr.mxu0 0.0
    %763 = vmatpush1.msra.mxu0 0.0
    %764 = vmatprep.subr.mxu0 0.0
    %765 = vmatpush1.msra.mxu0 0.0
    %766 = vmatprep.subr.mxu0 0.0
    %767 = vmatpush1.msra.mxu0 0.0
    %768 = vmatprep.subr.mxu0 0.0
    %769 = vmatpush1.msra.mxu0 0.0
    %770 = vmatprep.subr.mxu0 0.0
    %771 = vmatpush1.msra.mxu0 0.0
    %772 = vmatprep.subr.mxu0 0.0
    %773 = vmatpush1.msra.mxu0 0.0
    %774 = vmatprep.subr.mxu0 0.0
    %775 = vmatpush1.msra.mxu0 0.0
    %776 = vmatprep.subr.mxu0 0.0
    %777 = vmatpush1.msra.mxu0 0.0
    %778 = vmatprep.subr.mxu0 0.0
    %779 = vmatpush1.msra.mxu0 0.0
    %780 = vmatprep.subr.mxu0 0.0
    %781 = vmatpush1.msra.mxu0 0.0
    %782 = vmatprep.subr.mxu0 0.0
    %783 = vmatpush1.msra.mxu0 0.0
    %784 = vmatprep.subr.mxu0 0.0
    %785 = vmatpush1.msra.mxu0 0.0
    %786 = vmatprep.subr.mxu0 0.0
    %787 = vmatpush1.msra.mxu0 0.0
    %788 = vmatprep.subr.mxu0 0.0
    %789 = vmatpush1.msra.mxu0 0.0
    %790 = vmatprep.subr.mxu0 0.0
    %791 = vmatpush1.msra.mxu0 0.0
    %792 = vmatprep.subr.mxu0 0.0
    %793 = vmatpush1.msra.mxu0 0.0
    %794 = vmatprep.subr.mxu0 0.0
    %795 = vmatpush1.msra.mxu0 0.0
    %796 = vmatprep.subr.mxu0 0.0
    %797 = vmatpush1.msra.mxu0 0.0
    %798 = vmatprep.subr.mxu0 0.0
    %799 = vmatpush1.msra.mxu0 0.0
    %800 = vmatprep.subr.mxu0 0.0
    %801 = vmatpush1.msra.mxu0 0.0
    %802 = vmatprep.subr.mxu0 0.0
    %803 = vmatpush1.msra.mxu0 0.0
    %804 = vmatprep.subr.mxu0 0.0
    %805 = vmatpush1.msra.mxu0 0.0
    %806 = vmatprep.subr.mxu0 0.0
    %807 = vmatpush1.msra.mxu0 0.0
    %808 = vmatprep.subr.mxu0 0.0
    %809 = vmatpush1.msra.mxu0 0.0
    %810 = vmatprep.subr.mxu0 0.0
    %811 = vmatpush1.msra.mxu0 0.0
    %812 = vmatprep.subr.mxu0 0.0
    %813 = vmatpush1.msra.mxu0 0.0
    %814 = vmatprep.subr.mxu0 0.0
    %815 = vmatpush1.msra.mxu0 0.0
    %816 = vmatprep.subr.mxu0 0.0
    %817 = vmatpush1.msra.mxu0 0.0
    %818 = vmatprep.mubr.f32.mxu0 0.0
    %819 = vmatmul.mubr.f32.gmra.mrb[0].mxu0 %v752
    %v820 = vpop.f32.mrb[0].mxu0
    %v821 = vadd.f32 0.0, %v820
    %v822 = vpop.f32.mrb[0].mxu0
    %823 = vdwg.mxu0
    %824 = vrot.lane.b32.xlu0 %v161, 112
    %v825 = vpop.permute.xlu0 %824
    %826 = vrot.lane.b32.xlu0 %v152, 80
    %v827 = vpop.permute.xlu0 %826
    %v828 = vsel %vm166, %v825, 0
    %v830 = vsel %vm166, %v827, 0
    %832 = vmatprep.subr.mxu0 0.0
    %833 = vmatpush1.xpose.msra.mxu0 %v830
    %834 = vmatprep.subr.mxu0 0.0
    %835 = vmatpush1.xpose.msra.mxu0 0.0
    %836 = vmatprep.subr.mxu0 0.0
    %837 = vmatpush1.xpose.msra.mxu0 0.0
    %838 = vmatprep.subr.mxu0 0.0
    %839 = vmatpush1.xpose.msra.mxu0 0.0
    %840 = vmatprep.subr.mxu0 0.0
    %841 = vmatpush1.xpose.msra.mxu0 0.0
    %842 = vmatprep.subr.mxu0 0.0
    %843 = vmatpush1.xpose.msra.mxu0 0.0
    %844 = vmatprep.subr.mxu0 0.0
    %845 = vmatpush1.xpose.msra.mxu0 0.0
    %846 = vmatprep.subr.mxu0 0.0
    %847 = vmatpush1.xpose.msra.mxu0 0.0
    %848 = vmatprep.subr.mxu0 0.0
    %849 = vmatpush1.xpose.msra.mxu0 0.0
    %850 = vmatprep.subr.mxu0 0.0
    %851 = vmatpush1.xpose.msra.mxu0 0.0
    %852 = vmatprep.subr.mxu0 0.0
    %853 = vmatpush1.xpose.msra.mxu0 0.0
    %854 = vmatprep.subr.mxu0 0.0
    %855 = vmatpush1.xpose.msra.mxu0 0.0
    %856 = vmatprep.subr.mxu0 0.0
    %857 = vmatpush1.xpose.msra.mxu0 0.0
    %858 = vmatprep.subr.mxu0 0.0
    %859 = vmatpush1.xpose.msra.mxu0 0.0
    %860 = vmatprep.subr.mxu0 0.0
    %861 = vmatpush1.xpose.msra.mxu0 0.0
    %862 = vmatprep.subr.mxu0 0.0
    %863 = vmatpush1.xpose.msra.mxu0 0.0
    %864 = vmatprep.subr.mxu0 0.0
    %865 = vmatpush1.xpose.msra.mxu0 0.0
    %866 = vmatprep.subr.mxu0 0.0
    %867 = vmatpush1.xpose.msra.mxu0 0.0
    %868 = vmatprep.subr.mxu0 0.0
    %869 = vmatpush1.xpose.msra.mxu0 0.0
    %870 = vmatprep.subr.mxu0 0.0
    %871 = vmatpush1.xpose.msra.mxu0 0.0
    %872 = vmatprep.subr.mxu0 0.0
    %873 = vmatpush1.xpose.msra.mxu0 0.0
    %874 = vmatprep.subr.mxu0 0.0
    %875 = vmatpush1.xpose.msra.mxu0 0.0
    %876 = vmatprep.subr.mxu0 0.0
    %877 = vmatpush1.xpose.msra.mxu0 0.0
    %878 = vmatprep.subr.mxu0 0.0
    %879 = vmatpush1.xpose.msra.mxu0 0.0
    %880 = vmatprep.subr.mxu0 0.0
    %881 = vmatpush1.xpose.msra.mxu0 0.0
    %882 = vmatprep.subr.mxu0 0.0
    %883 = vmatpush1.xpose.msra.mxu0 0.0
    %884 = vmatprep.subr.mxu0 0.0
    %885 = vmatpush1.xpose.msra.mxu0 0.0
    %886 = vmatprep.subr.mxu0 0.0
    %887 = vmatpush1.xpose.msra.mxu0 0.0
    %888 = vmatprep.subr.mxu0 0.0
    %889 = vmatpush1.xpose.msra.mxu0 0.0
    %890 = vmatprep.subr.mxu0 0.0
    %891 = vmatpush1.xpose.msra.mxu0 0.0
    %892 = vmatprep.subr.mxu0 0.0
    %893 = vmatpush1.xpose.msra.mxu0 0.0
    %894 = vmatprep.subr.mxu0 0.0
    %895 = vmatpush1.xpose.msra.mxu0 0.0
    %896 = vmatprep.mubr.f32.mxu0 0.0
    %897 = vmatmul.mubr.f32.gmra.mrb[0].mxu0 %v828
    %v898 = vpop.f32.mrb[0].mxu0
    %v899 = vadd.f32 %v160, %v898
    %v900 = vpop.f32.mrb[0].mxu0
    %901 = vdwg.mxu0
    %902 = vrot.lane.b32.xlu0 %v162, 112
    %v903 = vpop.permute.xlu0 %902
    %904 = vrot.lane.b32.xlu0 %v157, 80
    %v905 = vpop.permute.xlu0 %904
    %v906 = vsel %vm166, %v903, 0
    %v908 = vsel %vm166, %v905, 0
    %910 = vmatprep.subr.mxu0 0.0
    %911 = vmatpush1.xpose.msra.mxu0 %v908
    %912 = vmatprep.subr.mxu0 0.0
    %913 = vmatpush1.xpose.msra.mxu0 0.0
    %914 = vmatprep.subr.mxu0 0.0
    %915 = vmatpush1.xpose.msra.mxu0 0.0
    %916 = vmatprep.subr.mxu0 0.0
    %917 = vmatpush1.xpose.msra.mxu0 0.0
    %918 = vmatprep.subr.mxu0 0.0
    %919 = vmatpush1.xpose.msra.mxu0 0.0
    %920 = vmatprep.subr.mxu0 0.0
    %921 = vmatpush1.xpose.msra.mxu0 0.0
    %922 = vmatprep.subr.mxu0 0.0
    %923 = vmatpush1.xpose.msra.mxu0 0.0
    %924 = vmatprep.subr.mxu0 0.0
    %925 = vmatpush1.xpose.msra.mxu0 0.0
    %926 = vmatprep.subr.mxu0 0.0
    %927 = vmatpush1.xpose.msra.mxu0 0.0
    %928 = vmatprep.subr.mxu0 0.0
    %929 = vmatpush1.xpose.msra.mxu0 0.0
    %930 = vmatprep.subr.mxu0 0.0
    %931 = vmatpush1.xpose.msra.mxu0 0.0
    %932 = vmatprep.subr.mxu0 0.0
    %933 = vmatpush1.xpose.msra.mxu0 0.0
    %934 = vmatprep.subr.mxu0 0.0
    %935 = vmatpush1.xpose.msra.mxu0 0.0
    %936 = vmatprep.subr.mxu0 0.0
    %937 = vmatpush1.xpose.msra.mxu0 0.0
    %938 = vmatprep.subr.mxu0 0.0
    %939 = vmatpush1.xpose.msra.mxu0 0.0
    %940 = vmatprep.subr.mxu0 0.0
    %941 = vmatpush1.xpose.msra.mxu0 0.0
    %942 = vmatprep.subr.mxu0 0.0
    %943 = vmatpush1.xpose.msra.mxu0 0.0
    %944 = vmatprep.subr.mxu0 0.0
    %945 = vmatpush1.xpose.msra.mxu0 0.0
    %946 = vmatprep.subr.mxu0 0.0
    %947 = vmatpush1.xpose.msra.mxu0 0.0
    %948 = vmatprep.subr.mxu0 0.0
    %949 = vmatpush1.xpose.msra.mxu0 0.0
    %950 = vmatprep.subr.mxu0 0.0
    %951 = vmatpush1.xpose.msra.mxu0 0.0
    %952 = vmatprep.subr.mxu0 0.0
    %953 = vmatpush1.xpose.msra.mxu0 0.0
    %954 = vmatprep.subr.mxu0 0.0
    %955 = vmatpush1.xpose.msra.mxu0 0.0
    %956 = vmatprep.subr.mxu0 0.0
    %957 = vmatpush1.xpose.msra.mxu0 0.0
    %958 = vmatprep.subr.mxu0 0.0
    %959 = vmatpush1.xpose.msra.mxu0 0.0
    %960 = vmatprep.subr.mxu0 0.0
    %961 = vmatpush1.xpose.msra.mxu0 0.0
    %962 = vmatprep.subr.mxu0 0.0
    %963 = vmatpush1.xpose.msra.mxu0 0.0
    %964 = vmatprep.subr.mxu0 0.0
    %965 = vmatpush1.xpose.msra.mxu0 0.0
    %966 = vmatprep.subr.mxu0 0.0
    %967 = vmatpush1.xpose.msra.mxu0 0.0
    %968 = vmatprep.subr.mxu0 0.0
    %969 = vmatpush1.xpose.msra.mxu0 0.0
    %970 = vmatprep.subr.mxu0 0.0
    %971 = vmatpush1.xpose.msra.mxu0 0.0
    %972 = vmatprep.subr.mxu0 0.0
    %973 = vmatpush1.xpose.msra.mxu0 0.0
    %974 = vmatprep.mubr.f32.mxu0 0.0
    %975 = vmatmul.mubr.f32.gmra.mrb[0].mxu0 %v906
    %v976 = vpop.f32.mrb[0].mxu0
    %v977 = vadd.f32 %v160, %v976
    %v978 = vpop.f32.mrb[0].mxu0
    %979 = vdwg.mxu0
    %v980 = vsel %vm166, %v899, -inf
    %981 = vmax.xlane.f32.xlu0 %v980
    %v982 = vpop.xlane.xlu0 %981
    %v983 = vsel %vm166, %v977, -inf
    %984 = vmax.xlane.f32.xlu0 %v983
    %v985 = vpop.xlane.xlu0 %984
    %v986 = vsub.f32 %v899, %v982
    %v987 = vsub.f32 %v977, %v985
    %v988 = vmul.f32 %v986, 1.442695
    %v989 = vpow.pop %v988
    %v990 = vmul.f32 %v987, 1.442695
    %v991 = vpow.pop %v990
    %v992 = vsel %vm166, %v989, 0.0
    %993 = vadd.xlane.f32.xlu0 %v992
    %v994 = vpop.xlane.xlu0 %993
    %v995 = vsel %vm166, %v991, 0.0
    %996 = vadd.xlane.f32.xlu0 %v995
    %v997 = vpop.xlane.xlu0 %996
    %v998 = vrcp.pop %v994
    %v999 = vmul.f32 %v989, %v998
    %v1000 = vrcp.pop %v997
    %v1001 = vmul.f32 %v991, %v1000
    %1002 = vrot.lane.b32.xlu0 %v152, 48
    %v1003 = vpop.permute.xlu0 %1002
    %v1006 = vsel %vm166, %v999, 0
    %1008 = vmatprep.subr.mxu0 0.0
    %1009 = vmatpush1.msra.mxu0 %v1003
    %1010 = vmatprep.subr.mxu0 0.0
    %1011 = vmatpush1.msra.mxu0 0.0
    %1012 = vmatprep.subr.mxu0 0.0
    %1013 = vmatpush1.msra.mxu0 0.0
    %1014 = vmatprep.subr.mxu0 0.0
    %1015 = vmatpush1.msra.mxu0 0.0
    %1016 = vmatprep.subr.mxu0 0.0
    %1017 = vmatpush1.msra.mxu0 0.0
    %1018 = vmatprep.subr.mxu0 0.0
    %1019 = vmatpush1.msra.mxu0 0.0
    %1020 = vmatprep.subr.mxu0 0.0
    %1021 = vmatpush1.msra.mxu0 0.0
    %1022 = vmatprep.subr.mxu0 0.0
    %1023 = vmatpush1.msra.mxu0 0.0
    %1024 = vmatprep.subr.mxu0 0.0
    %1025 = vmatpush1.msra.mxu0 0.0
    %1026 = vmatprep.subr.mxu0 0.0
    %1027 = vmatpush1.msra.mxu0 0.0
    %1028 = vmatprep.subr.mxu0 0.0
    %1029 = vmatpush1.msra.mxu0 0.0
    %1030 = vmatprep.subr.mxu0 0.0
    %1031 = vmatpush1.msra.mxu0 0.0
    %1032 = vmatprep.subr.mxu0 0.0
    %1033 = vmatpush1.msra.mxu0 0.0
    %1034 = vmatprep.subr.mxu0 0.0
    %1035 = vmatpush1.msra.mxu0 0.0
    %1036 = vmatprep.subr.mxu0 0.0
    %1037 = vmatpush1.msra.mxu0 0.0
    %1038 = vmatprep.subr.mxu0 0.0
    %1039 = vmatpush1.msra.mxu0 0.0
    %1040 = vmatprep.subr.mxu0 0.0
    %1041 = vmatpush1.msra.mxu0 0.0
    %1042 = vmatprep.subr.mxu0 0.0
    %1043 = vmatpush1.msra.mxu0 0.0
    %1044 = vmatprep.subr.mxu0 0.0
    %1045 = vmatpush1.msra.mxu0 0.0
    %1046 = vmatprep.subr.mxu0 0.0
    %1047 = vmatpush1.msra.mxu0 0.0
    %1048 = vmatprep.subr.mxu0 0.0
    %1049 = vmatpush1.msra.mxu0 0.0
    %1050 = vmatprep.subr.mxu0 0.0
    %1051 = vmatpush1.msra.mxu0 0.0
    %1052 = vmatprep.subr.mxu0 0.0
    %1053 = vmatpush1.msra.mxu0 0.0
    %1054 = vmatprep.subr.mxu0 0.0
    %1055 = vmatpush1.msra.mxu0 0.0
    %1056 = vmatprep.subr.mxu0 0.0
    %1057 = vmatpush1.msra.mxu0 0.0
    %1058 = vmatprep.subr.mxu0 0.0
    %1059 = vmatpush1.msra.mxu0 0.0
    %1060 = vmatprep.subr.mxu0 0.0
    %1061 = vmatpush1.msra.mxu0 0.0
    %1062 = vmatprep.subr.mxu0 0.0
    %1063 = vmatpush1.msra.mxu0 0.0
    %1064 = vmatprep.subr.mxu0 0.0
    %1065 = vmatpush1.msra.mxu0 0.0
    %1066 = vmatprep.subr.mxu0 0.0
    %1067 = vmatpush1.msra.mxu0 0.0
    %1068 = vmatprep.subr.mxu0 0.0
    %1069 = vmatpush1.msra.mxu0 0.0
    %1070 = vmatprep.subr.mxu0 0.0
    %1071 = vmatpush1.msra.mxu0 0.0
    %1072 = vmatprep.mubr.f32.mxu0 0.0
    %1073 = vmatmul.mubr.f32.gmra.mrb[0].mxu0 %v1006
    %v1074 = vpop.f32.mrb[0].mxu0
    %v1075 = vadd.f32 0.0, %v1074
    %v1076 = vpop.f32.mrb[0].mxu0
    %1077 = vdwg.mxu0
    %1078 = vrot.lane.b32.xlu0 %v157, 48
    %v1079 = vpop.permute.xlu0 %1078
    %v1082 = vsel %vm166, %v1001, 0
    %1084 = vmatprep.subr.mxu0 0.0
    %1085 = vmatpush1.msra.mxu0 %v1079
    %1086 = vmatprep.subr.mxu0 0.0
    %1087 = vmatpush1.msra.mxu0 0.0
    %1088 = vmatprep.subr.mxu0 0.0
    %1089 = vmatpush1.msra.mxu0 0.0
    %1090 = vmatprep.subr.mxu0 0.0
    %1091 = vmatpush1.msra.mxu0 0.0
    %1092 = vmatprep.subr.mxu0 0.0
    %1093 = vmatpush1.msra.mxu0 0.0
    %1094 = vmatprep.subr.mxu0 0.0
    %1095 = vmatpush1.msra.mxu0 0.0
    %1096 = vmatprep.subr.mxu0 0.0
    %1097 = vmatpush1.msra.mxu0 0.0
    %1098 = vmatprep.subr.mxu0 0.0
    %1099 = vmatpush1.msra.mxu0 0.0
    %1100 = vmatprep.subr.mxu0 0.0
    %1101 = vmatpush1.msra.mxu0 0.0
    %1102 = vmatprep.subr.mxu0 0.0
    %1103 = vmatpush1.msra.mxu0 0.0
    %1104 = vmatprep.subr.mxu0 0.0
    %1105 = vmatpush1.msra.mxu0 0.0
    %1106 = vmatprep.subr.mxu0 0.0
    %1107 = vmatpush1.msra.mxu0 0.0
    %1108 = vmatprep.subr.mxu0 0.0
    %1109 = vmatpush1.msra.mxu0 0.0
    %1110 = vmatprep.subr.mxu0 0.0
    %1111 = vmatpush1.msra.mxu0 0.0
    %1112 = vmatprep.subr.mxu0 0.0
    %1113 = vmatpush1.msra.mxu0 0.0
    %1114 = vmatprep.subr.mxu0 0.0
    %1115 = vmatpush1.msra.mxu0 0.0
    %1116 = vmatprep.subr.mxu0 0.0
    %1117 = vmatpush1.msra.mxu0 0.0
    %1118 = vmatprep.subr.mxu0 0.0
    %1119 = vmatpush1.msra.mxu0 0.0
    %1120 = vmatprep.subr.mxu0 0.0
    %1121 = vmatpush1.msra.mxu0 0.0
    %1122 = vmatprep.subr.mxu0 0.0
    %1123 = vmatpush1.msra.mxu0 0.0
    %1124 = vmatprep.subr.mxu0 0.0
    %1125 = vmatpush1.msra.mxu0 0.0
    %1126 = vmatprep.subr.mxu0 0.0
    %1127 = vmatpush1.msra.mxu0 0.0
    %1128 = vmatprep.subr.mxu0 0.0
    %1129 = vmatpush1.msra.mxu0 0.0
    %1130 = vmatprep.subr.mxu0 0.0
    %1131 = vmatpush1.msra.mxu0 0.0
    %1132 = vmatprep.subr.mxu0 0.0
    %1133 = vmatpush1.msra.mxu0 0.0
    %1134 = vmatprep.subr.mxu0 0.0
    %1135 = vmatpush1.msra.mxu0 0.0
    %1136 = vmatprep.subr.mxu0 0.0
    %1137 = vmatpush1.msra.mxu0 0.0
    %1138 = vmatprep.subr.mxu0 0.0
    %1139 = vmatpush1.msra.mxu0 0.0
    %1140 = vmatprep.subr.mxu0 0.0
    %1141 = vmatpush1.msra.mxu0 0.0
    %1142 = vmatprep.subr.mxu0 0.0
    %1143 = vmatpush1.msra.mxu0 0.0
    %1144 = vmatprep.subr.mxu0 0.0
    %1145 = vmatpush1.msra.mxu0 0.0
    %1146 = vmatprep.subr.mxu0 0.0
    %1147 = vmatpush1.msra.mxu0 0.0
    %1148 = vmatprep.mubr.f32.mxu0 0.0
    %1149 = vmatmul.mubr.f32.gmra.mrb[0].mxu0 %v1082
    %v1150 = vpop.f32.mrb[0].mxu0
    %v1151 = vadd.f32 0.0, %v1150
    %v1152 = vpop.f32.mrb[0].mxu0
    %1153 = vdwg.mxu0
    %1154 = vrot.lane.b32.xlu0 %v161, 104
    %v1155 = vpop.permute.xlu0 %1154
    %1156 = vrot.lane.b32.xlu0 %v152, 72
    %v1157 = vpop.permute.xlu0 %1156
    %v1158 = vsel %vm166, %v1155, 0
    %v1160 = vsel %vm166, %v1157, 0
    %1162 = vmatprep.subr.mxu0 0.0
    %1163 = vmatpush1.xpose.msra.mxu0 %v1160
    %1164 = vmatprep.subr.mxu0 0.0
    %1165 = vmatpush1.xpose.msra.mxu0 0.0
    %1166 = vmatprep.subr.mxu0 0.0
    %1167 = vmatpush1.xpose.msra.mxu0 0.0
    %1168 = vmatprep.subr.mxu0 0.0
    %1169 = vmatpush1.xpose.msra.mxu0 0.0
    %1170 = vmatprep.subr.mxu0 0.0
    %1171 = vmatpush1.xpose.msra.mxu0 0.0
    %1172 = vmatprep.subr.mxu0 0.0
    %1173 = vmatpush1.xpose.msra.mxu0 0.0
    %1174 = vmatprep.subr.mxu0 0.0
    %1175 = vmatpush1.xpose.msra.mxu0 0.0
    %1176 = vmatprep.subr.mxu0 0.0
    %1177 = vmatpush1.xpose.msra.mxu0 0.0
    %1178 = vmatprep.subr.mxu0 0.0
    %1179 = vmatpush1.xpose.msra.mxu0 0.0
    %1180 = vmatprep.subr.mxu0 0.0
    %1181 = vmatpush1.xpose.msra.mxu0 0.0
    %1182 = vmatprep.subr.mxu0 0.0
    %1183 = vmatpush1.xpose.msra.mxu0 0.0
    %1184 = vmatprep.subr.mxu0 0.0
    %1185 = vmatpush1.xpose.msra.mxu0 0.0
    %1186 = vmatprep.subr.mxu0 0.0
    %1187 = vmatpush1.xpose.msra.mxu0 0.0
    %1188 = vmatprep.subr.mxu0 0.0
    %1189 = vmatpush1.xpose.msra.mxu0 0.0
    %1190 = vmatprep.subr.mxu0 0.0
    %1191 = vmatpush1.xpose.msra.mxu0 0.0
    %1192 = vmatprep.subr.mxu0 0.0
    %1193 = vmatpush1.xpose.msra.mxu0 0.0
    %1194 = vmatprep.subr.mxu0 0.0
    %1195 = vmatpush1.xpose.msra.mxu0 0.0
    %1196 = vmatprep.subr.mxu0 0.0
    %1197 = vmatpush1.xpose.msra.mxu0 0.0
    %1198 = vmatprep.subr.mxu0 0.0
    %1199 = vmatpush1.xpose.msra.mxu0 0.0
    %1200 = vmatprep.subr.mxu0 0.0
    %1201 = vmatpush1.xpose.msra.mxu0 0.0
    %1202 = vmatprep.subr.mxu0 0.0
    %1203 = vmatpush1.xpose.msra.mxu0 0.0
    %1204 = vmatprep.subr.mxu0 0.0
    %1205 = vmatpush1.xpose.msra.mxu0 0.0
    %1206 = vmatprep.subr.mxu0 0.0
    %1207 = vmatpush1.xpose.msra.mxu0 0.0
    %1208 = vmatprep.subr.mxu0 0.0
    %1209 = vmatpush1.xpose.msra.mxu0 0.0
    %1210 = vmatprep.subr.mxu0 0.0
    %1211 = vmatpush1.xpose.msra.mxu0 0.0
    %1212 = vmatprep.subr.mxu0 0.0
    %1213 = vmatpush1.xpose.msra.mxu0 0.0
    %1214 = vmatprep.subr.mxu0 0.0
    %1215 = vmatpush1.xpose.msra.mxu0 0.0
    %1216 = vmatprep.subr.mxu0 0.0
    %1217 = vmatpush1.xpose.msra.mxu0 0.0
    %1218 = vmatprep.subr.mxu0 0.0
    %1219 = vmatpush1.xpose.msra.mxu0 0.0
    %1220 = vmatprep.subr.mxu0 0.0
    %1221 = vmatpush1.xpose.msra.mxu0 0.0
    %1222 = vmatprep.subr.mxu0 0.0
    %1223 = vmatpush1.xpose.msra.mxu0 0.0
    %1224 = vmatprep.subr.mxu0 0.0
    %1225 = vmatpush1.xpose.msra.mxu0 0.0
    %1226 = vmatprep.mubr.f32.mxu0 0.0
    %1227 = vmatmul.mubr.f32.gmra.mrb[0].mxu0 %v1158
    %v1228 = vpop.f32.mrb[0].mxu0
    %v1229 = vadd.f32 %v160, %v1228
    %v1230 = vpop.f32.mrb[0].mxu0
    %1231 = vdwg.mxu0
    %1232 = vrot.lane.b32.xlu0 %v162, 104
    %v1233 = vpop.permute.xlu0 %1232
    %1234 = vrot.lane.b32.xlu0 %v157, 72
    %v1235 = vpop.permute.xlu0 %1234
    %v1236 = vsel %vm166, %v1233, 0
    %v1238 = vsel %vm166, %v1235, 0
    %1240 = vmatprep.subr.mxu0 0.0
    %1241 = vmatpush1.xpose.msra.mxu0 %v1238
    %1242 = vmatprep.subr.mxu0 0.0
    %1243 = vmatpush1.xpose.msra.mxu0 0.0
    %1244 = vmatprep.subr.mxu0 0.0
    %1245 = vmatpush1.xpose.msra.mxu0 0.0
    %1246 = vmatprep.subr.mxu0 0.0
    %1247 = vmatpush1.xpose.msra.mxu0 0.0
    %1248 = vmatprep.subr.mxu0 0.0
    %1249 = vmatpush1.xpose.msra.mxu0 0.0
    %1250 = vmatprep.subr.mxu0 0.0
    %1251 = vmatpush1.xpose.msra.mxu0 0.0
    %1252 = vmatprep.subr.mxu0 0.0
    %1253 = vmatpush1.xpose.msra.mxu0 0.0
    %1254 = vmatprep.subr.mxu0 0.0
    %1255 = vmatpush1.xpose.msra.mxu0 0.0
    %1256 = vmatprep.subr.mxu0 0.0
    %1257 = vmatpush1.xpose.msra.mxu0 0.0
    %1258 = vmatprep.subr.mxu0 0.0
    %1259 = vmatpush1.xpose.msra.mxu0 0.0
    %1260 = vmatprep.subr.mxu0 0.0
    %1261 = vmatpush1.xpose.msra.mxu0 0.0
    %1262 = vmatprep.subr.mxu0 0.0
    %1263 = vmatpush1.xpose.msra.mxu0 0.0
    %1264 = vmatprep.subr.mxu0 0.0
    %1265 = vmatpush1.xpose.msra.mxu0 0.0
    %1266 = vmatprep.subr.mxu0 0.0
    %1267 = vmatpush1.xpose.msra.mxu0 0.0
    %1268 = vmatprep.subr.mxu0 0.0
    %1269 = vmatpush1.xpose.msra.mxu0 0.0
    %1270 = vmatprep.subr.mxu0 0.0
    %1271 = vmatpush1.xpose.msra.mxu0 0.0
    %1272 = vmatprep.subr.mxu0 0.0
    %1273 = vmatpush1.xpose.msra.mxu0 0.0
    %1274 = vmatprep.subr.mxu0 0.0
    %1275 = vmatpush1.xpose.msra.mxu0 0.0
    %1276 = vmatprep.subr.mxu0 0.0
    %1277 = vmatpush1.xpose.msra.mxu0 0.0
    %1278 = vmatprep.subr.mxu0 0.0
    %1279 = vmatpush1.xpose.msra.mxu0 0.0
    %1280 = vmatprep.subr.mxu0 0.0
    %1281 = vmatpush1.xpose.msra.mxu0 0.0
    %1282 = vmatprep.subr.mxu0 0.0
    %1283 = vmatpush1.xpose.msra.mxu0 0.0
    %1284 = vmatprep.subr.mxu0 0.0
    %1285 = vmatpush1.xpose.msra.mxu0 0.0
    %1286 = vmatprep.subr.mxu0 0.0
    %1287 = vmatpush1.xpose.msra.mxu0 0.0
    %1288 = vmatprep.subr.mxu0 0.0
    %1289 = vmatpush1.xpose.msra.mxu0 0.0
    %1290 = vmatprep.subr.mxu0 0.0
    %1291 = vmatpush1.xpose.msra.mxu0 0.0
    %1292 = vmatprep.subr.mxu0 0.0
    %1293 = vmatpush1.xpose.msra.mxu0 0.0
    %1294 = vmatprep.subr.mxu0 0.0
    %1295 = vmatpush1.xpose.msra.mxu0 0.0
    %1296 = vmatprep.subr.mxu0 0.0
    %1297 = vmatpush1.xpose.msra.mxu0 0.0
    %1298 = vmatprep.subr.mxu0 0.0
    %1299 = vmatpush1.xpose.msra.mxu0 0.0
    %1300 = vmatprep.subr.mxu0 0.0
    %1301 = vmatpush1.xpose.msra.mxu0 0.0
    %1302 = vmatprep.subr.mxu0 0.0
    %1303 = vmatpush1.xpose.msra.mxu0 0.0
    %1304 = vmatprep.mubr.f32.mxu0 0.0
    %1305 = vmatmul.mubr.f32.gmra.mrb[0].mxu0 %v1236
    %v1306 = vpop.f32.mrb[0].mxu0
    %v1307 = vadd.f32 %v160, %v1306
    %v1308 = vpop.f32.mrb[0].mxu0
    %1309 = vdwg.mxu0
    %v1310 = vsel %vm166, %v1229, -inf
    %1311 = vmax.xlane.f32.xlu0 %v1310
    %v1312 = vpop.xlane.xlu0 %1311
    %v1313 = vsel %vm166, %v1307, -inf
    %1314 = vmax.xlane.f32.xlu0 %v1313
    %v1315 = vpop.xlane.xlu0 %1314
    %v1316 = vsub.f32 %v1229, %v1312
    %v1317 = vsub.f32 %v1307, %v1315
    %v1318 = vmul.f32 %v1316, 1.442695
    %v1319 = vpow.pop %v1318
    %v1320 = vmul.f32 %v1317, 1.442695
    %v1321 = vpow.pop %v1320
    %v1322 = vsel %vm166, %v1319, 0.0
    %1323 = vadd.xlane.f32.xlu0 %v1322
    %v1324 = vpop.xlane.xlu0 %1323
    %v1325 = vsel %vm166, %v1321, 0.0
    %1326 = vadd.xlane.f32.xlu0 %v1325
    %v1327 = vpop.xlane.xlu0 %1326
    %v1328 = vrcp.pop %v1324
    %v1329 = vmul.f32 %v1319, %v1328
    %v1330 = vrcp.pop %v1327
    %v1331 = vmul.f32 %v1321, %v1330
    %1332 = vrot.lane.b32.xlu0 %v152, 40
    %v1333 = vpop.permute.xlu0 %1332
    %v1336 = vsel %vm166, %v1329, 0
    %1338 = vmatprep.subr.mxu0 0.0
    %1339 = vmatpush1.msra.mxu0 %v1333
    %1340 = vmatprep.subr.mxu0 0.0
    %1341 = vmatpush1.msra.mxu0 0.0
    %1342 = vmatprep.subr.mxu0 0.0
    %1343 = vmatpush1.msra.mxu0 0.0
    %1344 = vmatprep.subr.mxu0 0.0
    %1345 = vmatpush1.msra.mxu0 0.0
    %1346 = vmatprep.subr.mxu0 0.0
    %1347 = vmatpush1.msra.mxu0 0.0
    %1348 = vmatprep.subr.mxu0 0.0
    %1349 = vmatpush1.msra.mxu0 0.0
    %1350 = vmatprep.subr.mxu0 0.0
    %1351 = vmatpush1.msra.mxu0 0.0
    %1352 = vmatprep.subr.mxu0 0.0
    %1353 = vmatpush1.msra.mxu0 0.0
    %1354 = vmatprep.subr.mxu0 0.0
    %1355 = vmatpush1.msra.mxu0 0.0
    %1356 = vmatprep.subr.mxu0 0.0
    %1357 = vmatpush1.msra.mxu0 0.0
    %1358 = vmatprep.subr.mxu0 0.0
    %1359 = vmatpush1.msra.mxu0 0.0
    %1360 = vmatprep.subr.mxu0 0.0
    %1361 = vmatpush1.msra.mxu0 0.0
    %1362 = vmatprep.subr.mxu0 0.0
    %1363 = vmatpush1.msra.mxu0 0.0
    %1364 = vmatprep.subr.mxu0 0.0
    %1365 = vmatpush1.msra.mxu0 0.0
    %1366 = vmatprep.subr.mxu0 0.0
    %1367 = vmatpush1.msra.mxu0 0.0
    %1368 = vmatprep.subr.mxu0 0.0
    %1369 = vmatpush1.msra.mxu0 0.0
    %1370 = vmatprep.subr.mxu0 0.0
    %1371 = vmatpush1.msra.mxu0 0.0
    %1372 = vmatprep.subr.mxu0 0.0
    %1373 = vmatpush1.msra.mxu0 0.0
    %1374 = vmatprep.subr.mxu0 0.0
    %1375 = vmatpush1.msra.mxu0 0.0
    %1376 = vmatprep.subr.mxu0 0.0
    %1377 = vmatpush1.msra.mxu0 0.0
    %1378 = vmatprep.subr.mxu0 0.0
    %1379 = vmatpush1.msra.mxu0 0.0
    %1380 = vmatprep.subr.mxu0 0.0
    %1381 = vmatpush1.msra.mxu0 0.0
    %1382 = vmatprep.subr.mxu0 0.0
    %1383 = vmatpush1.msra.mxu0 0.0
    %1384 = vmatprep.subr.mxu0 0.0
    %1385 = vmatpush1.msra.mxu0 0.0
    %1386 = vmatprep.subr.mxu0 0.0
    %1387 = vmatpush1.msra.mxu0 0.0
    %1388 = vmatprep.subr.mxu0 0.0
    %1389 = vmatpush1.msra.mxu0 0.0
    %1390 = vmatprep.subr.mxu0 0.0
    %1391 = vmatpush1.msra.mxu0 0.0
    %1392 = vmatprep.subr.mxu0 0.0
    %1393 = vmatpush1.msra.mxu0 0.0
    %1394 = vmatprep.subr.mxu0 0.0
    %1395 = vmatpush1.msra.mxu0 0.0
    %1396 = vmatprep.subr.mxu0 0.0
    %1397 = vmatpush1.msra.mxu0 0.0
    %1398 = vmatprep.subr.mxu0 0.0
    %1399 = vmatpush1.msra.mxu0 0.0
    %1400 = vmatprep.subr.mxu0 0.0
    %1401 = vmatpush1.msra.mxu0 0.0
    %1402 = vmatprep.mubr.f32.mxu0 0.0
    %1403 = vmatmul.mubr.f32.gmra.mrb[0].mxu0 %v1336
    %v1404 = vpop.f32.mrb[0].mxu0
    %v1405 = vadd.f32 0.0, %v1404
    %v1406 = vpop.f32.mrb[0].mxu0
    %1407 = vdwg.mxu0
    %1408 = vrot.lane.b32.xlu0 %v157, 40
    %v1409 = vpop.permute.xlu0 %1408
    %v1412 = vsel %vm166, %v1331, 0
    %1414 = vmatprep.subr.mxu0 0.0
    %1415 = vmatpush1.msra.mxu0 %v1409
    %1416 = vmatprep.subr.mxu0 0.0
    %1417 = vmatpush1.msra.mxu0 0.0
    %1418 = vmatprep.subr.mxu0 0.0
    %1419 = vmatpush1.msra.mxu0 0.0
    %1420 = vmatprep.subr.mxu0 0.0
    %1421 = vmatpush1.msra.mxu0 0.0
    %1422 = vmatprep.subr.mxu0 0.0
    %1423 = vmatpush1.msra.mxu0 0.0
    %1424 = vmatprep.subr.mxu0 0.0
    %1425 = vmatpush1.msra.mxu0 0.0
    %1426 = vmatprep.subr.mxu0 0.0
    %1427 = vmatpush1.msra.mxu0 0.0
    %1428 = vmatprep.subr.mxu0 0.0
    %1429 = vmatpush1.msra.mxu0 0.0
    %1430 = vmatprep.subr.mxu0 0.0
    %1431 = vmatpush1.msra.mxu0 0.0
    %1432 = vmatprep.subr.mxu0 0.0
    %1433 = vmatpush1.msra.mxu0 0.0
    %1434 = vmatprep.subr.mxu0 0.0
    %1435 = vmatpush1.msra.mxu0 0.0
    %1436 = vmatprep.subr.mxu0 0.0
    %1437 = vmatpush1.msra.mxu0 0.0
    %1438 = vmatprep.subr.mxu0 0.0
    %1439 = vmatpush1.msra.mxu0 0.0
    %1440 = vmatprep.subr.mxu0 0.0
    %1441 = vmatpush1.msra.mxu0 0.0
    %1442 = vmatprep.subr.mxu0 0.0
    %1443 = vmatpush1.msra.mxu0 0.0
    %1444 = vmatprep.subr.mxu0 0.0
    %1445 = vmatpush1.msra.mxu0 0.0
    %1446 = vmatprep.subr.mxu0 0.0
    %1447 = vmatpush1.msra.mxu0 0.0
    %1448 = vmatprep.subr.mxu0 0.0
    %1449 = vmatpush1.msra.mxu0 0.0
    %1450 = vmatprep.subr.mxu0 0.0
    %1451 = vmatpush1.msra.mxu0 0.0
    %1452 = vmatprep.subr.mxu0 0.0
    %1453 = vmatpush1.msra.mxu0 0.0
    %1454 = vmatprep.subr.mxu0 0.0
    %1455 = vmatpush1.msra.mxu0 0.0
    %1456 = vmatprep.subr.mxu0 0.0
    %1457 = vmatpush1.msra.mxu0 0.0
    %1458 = vmatprep.subr.mxu0 0.0
    %1459 = vmatpush1.msra.mxu0 0.0
    %1460 = vmatprep.subr.mxu0 0.0
    %1461 = vmatpush1.msra.mxu0 0.0
    %1462 = vmatprep.subr.mxu0 0.0
    %1463 = vmatpush1.msra.mxu0 0.0
    %1464 = vmatprep.subr.mxu0 0.0
    %1465 = vmatpush1.msra.mxu0 0.0
    %1466 = vmatprep.subr.mxu0 0.0
    %1467 = vmatpush1.msra.mxu0 0.0
    %1468 = vmatprep.subr.mxu0 0.0
    %1469 = vmatpush1.msra.mxu0 0.0
    %1470 = vmatprep.subr.mxu0 0.0
    %1471 = vmatpush1.msra.mxu0 0.0
    %1472 = vmatprep.subr.mxu0 0.0
    %1473 = vmatpush1.msra.mxu0 0.0
    %1474 = vmatprep.subr.mxu0 0.0
    %1475 = vmatpush1.msra.mxu0 0.0
    %1476 = vmatprep.subr.mxu0 0.0
    %1477 = vmatpush1.msra.mxu0 0.0
    %1478 = vmatprep.mubr.f32.mxu0 0.0
    %1479 = vmatmul.mubr.f32.gmra.mrb[0].mxu0 %v1412
    %v1480 = vpop.f32.mrb[0].mxu0
    %v1481 = vadd.f32 0.0, %v1480
    %v1482 = vpop.f32.mrb[0].mxu0
    %1483 = vdwg.mxu0
    %1486 = vrot.lane.b32.xlu0 %v745, 8
    %v1487 = vpop.permute.xlu0 %1486
    %1488 = vrot.lane.b32.xlu0 %v821, 8
    %v1489 = vpop.permute.xlu0 %1488
    %1494 = vrot.lane.b32.xlu0 %v1075, 16
    %v1495 = vpop.permute.xlu0 %1494
    %1496 = vrot.lane.b32.xlu0 %v1151, 16
    %v1497 = vpop.permute.xlu0 %1496
    %1502 = vrot.lane.b32.xlu0 %v1405, 24
    %v1503 = vpop.permute.xlu0 %1502
    %1504 = vrot.lane.b32.xlu0 %v1481, 24
    %v1505 = vpop.permute.xlu0 %1504
    %v1508 = vsel %vm166, %v415, %v1487
    %v1509 = vsel %vm166, %v491, %v1489
    %vm1510 = vcmask 130048
    %v1511 = vsel %vm1510, %v1508, %v1495
    %v1512 = vsel %vm1510, %v1509, %v1497
    %vm1513 = vcmask 195584
    %v1514 = vsel %vm1513, %v1511, %v1503
    %v1515 = vsel %vm1513, %v1512, %v1505
    %v1516 = vld [vmem:[#allocation7] sm:$0xff]
    %v1517 = vld [vmem:[#allocation7 + $0x8] sm:$0xff]
    %v1518 = vld [vmem:[#allocation7 + $0x10] sm:$0xff]
    %v1519 = vld [vmem:[#allocation7 + $0x18] sm:$0xff]
    %v1520 = vld [vmem:[%s4] sm:$0x1]
    %v1522 = vlaneseq
    %v1523 = vshrl.u32 %v1522, 7
    %v1524 = vsub.s32 0, %v1523
    %v1525 = vrot.slane %v1520, %v1524
    %v1528 = vsel %vm78, %v1514, 0
    %v1531 = vsel %vm78, %v1515, 0
    %1533 = vmatprep.subr.mxu0 0.0
    %1534 = vmatpush1.msra.mxu0 %v1516
    %1535 = vmatprep.subr.mxu0 0.0
    %1536 = vmatpush1.msra.mxu0 %v1517
    %1537 = vmatprep.subr.mxu0 0.0
    %1538 = vmatpush1.msra.mxu0 %v1518
    %1539 = vmatprep.subr.mxu0 0.0
    %1540 = vmatpush1.msra.mxu0 %v1519
    %1541 = vmatprep.subr.mxu0 0.0
    %1542 = vmatpush1.msra.mxu0 0.0
    %1543 = vmatprep.subr.mxu0 0.0
    %1544 = vmatpush1.msra.mxu0 0.0
    %1545 = vmatprep.subr.mxu0 0.0
    %1546 = vmatpush1.msra.mxu0 0.0
    %1547 = vmatprep.subr.mxu0 0.0
    %1548 = vmatpush1.msra.mxu0 0.0
    %1549 = vmatprep.subr.mxu0 0.0
    %1550 = vmatpush1.msra.mxu0 0.0
    %1551 = vmatprep.subr.mxu0 0.0
    %1552 = vmatpush1.msra.mxu0 0.0
    %1553 = vmatprep.subr.mxu0 0.0
    %1554 = vmatpush1.msra.mxu0 0.0
    %1555 = vmatprep.subr.mxu0 0.0
    %1556 = vmatpush1.msra.mxu0 0.0
    %1557 = vmatprep.subr.mxu0 0.0
    %1558 = vmatpush1.msra.mxu0 0.0
    %1559 = vmatprep.subr.mxu0 0.0
    %1560 = vmatpush1.msra.mxu0 0.0
    %1561 = vmatprep.subr.mxu0 0.0
    %1562 = vmatpush1.msra.mxu0 0.0
    %1563 = vmatprep.subr.mxu0 0.0
    %1564 = vmatpush1.msra.mxu0 0.0
    %1565 = vmatprep.subr.mxu0 0.0
    %1566 = vmatpush1.msra.mxu0 0.0
    %1567 = vmatprep.subr.mxu0 0.0
    %1568 = vmatpush1.msra.mxu0 0.0
    %1569 = vmatprep.subr.mxu0 0.0
    %1570 = vmatpush1.msra.mxu0 0.0
    %1571 = vmatprep.subr.mxu0 0.0
    %1572 = vmatpush1.msra.mxu0 0.0
    %1573 = vmatprep.subr.mxu0 0.0
    %1574 = vmatpush1.msra.mxu0 0.0
    %1575 = vmatprep.subr.mxu0 0.0
    %1576 = vmatpush1.msra.mxu0 0.0
    %1577 = vmatprep.subr.mxu0 0.0
    %1578 = vmatpush1.msra.mxu0 0.0
    %1579 = vmatprep.subr.mxu0 0.0
    %1580 = vmatpush1.msra.mxu0 0.0
    %1581 = vmatprep.subr.mxu0 0.0
    %1582 = vmatpush1.msra.mxu0 0.0
    %1583 = vmatprep.subr.mxu0 0.0
    %1584 = vmatpush1.msra.mxu0 0.0
    %1585 = vmatprep.subr.mxu0 0.0
    %1586 = vmatpush1.msra.mxu0 0.0
    %1587 = vmatprep.subr.mxu0 0.0
    %1588 = vmatpush1.msra.mxu0 0.0
    %1589 = vmatprep.subr.mxu0 0.0
    %1590 = vmatpush1.msra.mxu0 0.0
    %1591 = vmatprep.subr.mxu0 0.0
    %1592 = vmatpush1.msra.mxu0 0.0
    %1593 = vmatprep.subr.mxu0 0.0
    %1594 = vmatpush1.msra.mxu0 0.0
    %1595 = vmatprep.subr.mxu0 0.0
    %1596 = vmatpush1.msra.mxu0 0.0
    %1597 = vmatprep.mubr.f32.mxu0 0.0
    %1598 = vmatmul.mubr.f32.gmra.mrb[0].mxu0 %v1528
    %v1599 = vpop.f32.mrb[0].mxu0
    %v1600 = vadd.f32 %v1525, %v1599
    %v1601 = vpop.f32.mrb[0].mxu0
    %1602 = vmatprep.mubr.f32.mxu0 0.0
    %1603 = vmatmul.mubr.f32.gmra.mrb[0].mxu0 %v1531
    %v1604 = vpop.f32.mrb[0].mxu0
    %v1605 = vadd.f32 %v1525, %v1604
    %v1606 = vpop.f32.mrb[0].mxu0
    %1607 = vdwg.mxu0
    %1608 = vst.msk [vmem:[#allocation8] sm:$0xff] %vm78, %v1600
    %1609 = vst.msk [vmem:[#allocation8 + $0x8] sm:$0xff] %vm78, %v1605
    // Predicated region
    $region38: #{tpu_custom_call.1} parent=1 // pred_check
      _
    $region39: #{tpu_custom_call.1} parent=1 // pred_check_branch
      %1611 = sbr.rel (0) target = $region41
    $region40: #{tpu_custom_call.1} parent=1 // pred_region
      %s1613 = ssub.s32 256, 256
      %1614 = vsyncadd [#allocation4], %s1613
      %s1615 = sshll.u32 [#allocation8], 4
      %s1616 = int_to_ptr.vmem [resolvable:$true] %s1615
      %1621 = dma.vmem_to_hbm [thread:$0]  %s1616, 256, %s6, [#allocation4], 128, 128, 8
    $region41: #{tpu_custom_call.1} parent=1 // pred_fallthru
      _
    // Predicated region
    $region42: #{tpu_custom_call.1} parent=1 // pred_check
      _
    $region43: #{tpu_custom_call.1} parent=1 // pred_check_branch
      %1623 = sbr.rel (0) target = $region45
    $region44: #{tpu_custom_call.1} parent=1 // pred_region
      %1624 = dma.done [#allocation4], 256
    $region45: #{tpu_custom_call.1} parent=1 // pred_fallthru
      _
    %1625 = vsyncpa [#allocation3], 1
    %1626 = vsyncpa [#allocation6], 1
    %1627 = vsyncpa [#allocation4], 1

</llo_original>
